<compile_context>
chip_gen: v7x
topology: tpu7x:2x2x1
jax: 0.10.0
libtpu: 0.0.40
codegen_flags: <defaults>
</compile_context>

<pallas_src>
import jax
import jax.numpy as jnp
from jax.experimental import pallas as pl
from jax.experimental.pallas import tpu as pltpu

# ----------------------------- config ---------------------------------------
GEN = 8                       # unused in forward (kept for fidelity)
N_ACTIVE = 1                  # singles
ENTITY_DIM = 32               # config.entity_embedding_dim
N_VOLATILES = 10              # len(VOLATILES) (synthetic)
N_BOOSTS = 8
N_BOOST_CLASSES = 13
F_BV = N_BOOSTS * N_BOOST_CLASSES + N_VOLATILES   # 104 + 10 = 114
F_BV_PAD = 128                # lane-aligned K for the bv Linear
N_ENTITIES = 6                # pokemon per side
T, B = 2, 8
TB = T * B                    # 16


# ----------------------------- kernel ---------------------------------------
def _public_spatial_kernel(
    ent_ref,    # (2*TB, N, E)   side-major stacked entity embeddings
    rcnt_ref,   # (2*TB, 2)      [:,0]=1/active_count, [:,1]=1/reserve_count
    bv_ref,     # (2*TB, 128)    boosts-onehot + volatiles, zero-padded K
    scal_ref,   # (2*TB, E)      scalar_emb
    wsm_ref,    # (192, E)       [0:128]=w_bv_pad, [128:160]=w_proj_act, [160:192]=w_proj_res
    bsm_ref,    # (2, E)         [0]=b_bv, [1]=b_proj
    w64_ref,    # (5, 2E, 2E)    w11, w12, w21, w22, w_out
    b64_ref,    # (5, 2E)        b11, b12, b21, b22, b_out
    out_ref,    # (TB, 2E)
):
    f32 = jnp.float32
    E = ENTITY_DIM
    tb = out_ref.shape[0]

    ent = ent_ref[...]                                   # (2*TB, N, E)
    rcnt = rcnt_ref[...]                                 # (2*TB, 2)

    # masked-mean pooling: divides replaced by precomputed reciprocal counts
    # (with N_ACTIVE == 1 the active sum is a trip-1 reduce the compiler folds)
    act = jnp.sum(ent[:, :N_ACTIVE, :], axis=1) * rcnt[:, 0:1]
    res = jnp.sum(ent[:, N_ACTIVE:, :], axis=1) * rcnt[:, 1:2]

    wsm = wsm_ref[...]
    bsm = bsm_ref[...]

    # embed_boosts_volatiles Linear (K padded to 128; both sides in one matmul)
    bv = jnp.dot(bv_ref[...], wsm[:F_BV_PAD, :],
                 preferred_element_type=f32) + bsm[0:1, :]

    # project(cat(active + bv, reserve)) + scalar_emb
    # (project weight is split into its two E-wide K halves -> no concat needed)
    y = (jnp.dot(act + bv, wsm[F_BV_PAD:F_BV_PAD + E, :],
                 preferred_element_type=f32)
         + jnp.dot(res, wsm[F_BV_PAD + E:, :], preferred_element_type=f32)
         + bsm[1:2, :] + scal_ref[...])                  # (2*TB, E)

    # torch.flatten(spatial_emb, 1): concat the two side halves along features
    x = jnp.concatenate([y[:tb, :], y[tb:, :]], axis=-1)  # (TB, 2E)

    w64 = w64_ref[...]
    b64 = b64_ref[...]

    def resblock(x, w1, b1, w2, b2):
        h = jnp.maximum(
            jnp.dot(x, w1, preferred_element_type=f32) + b1, 0.0)
        return jnp.maximum(
            x + jnp.dot(h, w2, preferred_element_type=f32) + b2, 0.0)

    x = resblock(x, w64[0], b64[0:1], w64[1], b64[1:2])
    x = resblock(x, w64[2], b64[2:3], w64[3], b64[3:4])
    out_ref[...] = jnp.dot(x, w64[4], preferred_element_type=f32) + b64[4:5]


# ----------------------------- wrapper ---------------------------------------
def pallas_forward(entity_embeddings, mask, boosts, volatiles, scalar_emb, p):
    E = ENTITY_DIM
    tb = entity_embeddings.shape[0]

    # --- glue: one-hot boosts (Embedding(eye(13)) + Flatten) + concat volatiles
    boosts_oh = jax.nn.one_hot(boosts, N_BOOST_CLASSES, dtype=jnp.float32)
    boosts_oh = boosts_oh.reshape(
        boosts.shape[:-1] + (N_BOOSTS * N_BOOST_CLASSES,))
    bv_in = jnp.concatenate([boosts_oh, volatiles.astype(jnp.float32)], axis=-1)
    bv_in = bv_in.reshape(tb, 2, F_BV)              # flatten(0,1), drop n_active=1
    bv_in = jnp.pad(bv_in, ((0, 0), (0, 0), (0, F_BV_PAD - F_BV)))

    # --- glue: exact reciprocal masked counts (kernel only multiplies)
    mskf = mask[..., 0].astype(jnp.float32)         # (TB, 2, N)
    ract = 1.0 / jnp.maximum(mskf[..., :N_ACTIVE].sum(-1), 1.0)   # (TB, 2)
    rres = 1.0 / jnp.maximum(mskf[..., N_ACTIVE:].sum(-1), 1.0)   # (TB, 2)
    rcnt = jnp.stack([ract, rres], axis=-1)         # (TB, 2, 2)

    scal = scalar_emb.reshape(tb, 2, E)             # flatten(0,1)

    def side_major(x):                              # (TB, 2, ...) -> (2*TB, ...)
        return jnp.swapaxes(x, 0, 1).reshape((2 * tb,) + x.shape[2:])

    ent = side_major(entity_embeddings)             # (2*TB, N, E)
    rcnt = side_major(rcnt)                         # (2*TB, 2)
    bv_in = side_major(bv_in)                       # (2*TB, 128)
    scal = side_major(scal)                         # (2*TB, E)

    # --- pack 15 weight/bias operands into 4 slabs
    w_bv_pad = jnp.pad(p["w_bv"], ((0, F_BV_PAD - F_BV), (0, 0)))
    wsm = jnp.concatenate(
        [w_bv_pad, p["w_proj"][:E], p["w_proj"][E:]], axis=0)       # (192, E)
    bsm = jnp.concatenate([p["b_bv"], p["b_proj"]], axis=0)         # (2, E)
    w64 = jnp.stack(
        [p["w11"], p["w12"], p["w21"], p["w22"], p["w_out"]])       # (5, 2E, 2E)
    b64 = jnp.concatenate(
        [p["b11"], p["b12"], p["b21"], p["b22"], p["b_out"]], axis=0)  # (5, 2E)

    data = [ent, rcnt, bv_in, scal, wsm, bsm, w64, b64]

    def full_spec(shape):
        nd = len(shape)
        return pl.BlockSpec(tuple(shape), lambda i, nd=nd: (0,) * nd)

    flops = (2 * (2 * tb) * F_BV_PAD * E            # bv Linear
             + 2 * 2 * (2 * tb) * E * E             # project (two K halves)
             + 2 * 5 * tb * (2 * E) * (2 * E))      # resblocks + spatial_out
    bytes_accessed = (sum(int(x.size) * x.dtype.itemsize for x in data)
                      + tb * 2 * E * 4)

    return pl.pallas_call(
        _public_spatial_kernel,
        out_shape=jax.ShapeDtypeStruct((tb, 2 * E), jnp.float32),
        grid=(1,),
        in_specs=[full_spec(x.shape) for x in data],
        out_specs=pl.BlockSpec((tb, 2 * E), lambda i: (0, 0)),
        compiler_params=pltpu.CompilerParams(
            dimension_semantics=("arbitrary",)),
        cost_estimate=pl.CostEstimate(
            flops=flops, transcendentals=0, bytes_accessed=bytes_accessed),
    )(*data)


# ----------------------------- params ----------------------------------------
def init_params(key):
    E = ENTITY_DIM

    def linear(k, fin, fout):
        k1, k2 = jax.random.split(k)
        bound = 1.0 / float(fin) ** 0.5
        w = jax.random.uniform(k1, (fin, fout), jnp.float32, -bound, bound)
        b = jax.random.uniform(k2, (1, fout), jnp.float32, -bound, bound)
        return w, b

    ks = jax.random.split(key, 7)
    p = {}
    p["w_proj"], p["b_proj"] = linear(ks[0], 2 * E, E)
    p["w_bv"], p["b_bv"] = linear(ks[1], F_BV, E)
    p["w11"], p["b11"] = linear(ks[2], 2 * E, 2 * E)
    p["w12"], p["b12"] = linear(ks[3], 2 * E, 2 * E)
    p["w21"], p["b21"] = linear(ks[4], 2 * E, 2 * E)
    p["w22"], p["b22"] = linear(ks[5], 2 * E, 2 * E)
    p["w_out"], p["b_out"] = linear(ks[6], 2 * E, 2 * E)
    return p


# ----------------------------- pure-JAX reference -----------------------------
def reference_forward(entity_embeddings, mask, boosts, volatiles, scalar_emb, p):
    na = N_ACTIVE
    maskf = mask.astype(jnp.float32)
    active = entity_embeddings[..., :na, :].sum(axis=2, keepdims=True)
    active = active / jnp.maximum(
        maskf[..., :na, :].sum(axis=2, keepdims=True), 1.0)
    reserve = entity_embeddings[..., na:, :].sum(axis=2, keepdims=True)
    reserve = reserve / jnp.maximum(
        maskf[..., na:, :].sum(axis=2, keepdims=True), 1.0)
    boosts_oh = jax.nn.one_hot(boosts, N_BOOST_CLASSES, dtype=jnp.float32)
    boosts_oh = boosts_oh.reshape(
        boosts.shape[:-1] + (N_BOOSTS * N_BOOST_CLASSES,))
    bv = jnp.concatenate([boosts_oh, volatiles], axis=-1)
    bv = bv @ p["w_bv"] + p["b_bv"]
    bv = bv.reshape((-1,) + bv.shape[2:])                       # flatten(0,1)
    sc = scalar_emb.reshape((-1,) + scalar_emb.shape[2:])[:, :, None, :]
    sp = jnp.concatenate([active + bv, reserve], axis=-1)
    sp = sp @ p["w_proj"] + p["b_proj"] + sc
    sp = sp.reshape(sp.shape[0], -1)                            # flatten(1)
    for w1, b1, w2, b2 in [(p["w11"], p["b11"], p["w12"], p["b12"]),
                           (p["w21"], p["b21"], p["w22"], p["b22"])]:
        h = jnp.maximum(sp @ w1 + b1, 0.0)
        sp = jnp.maximum(sp + h @ w2 + b2, 0.0)
    return sp @ p["w_out"] + p["b_out"]


# ----------------------------- main -------------------------------------------
if __name__ == "__main__":
    key = jax.random.PRNGKey(0)
    kp, k1, k2, k3, k4, k5 = jax.random.split(key, 6)
    params = init_params(kp)

    entity_embeddings = jax.random.normal(
        k1, (TB, 2, N_ENTITIES, ENTITY_DIM), jnp.float32)
    mask = jax.random.uniform(k2, (TB, 2, N_ENTITIES, 1)) > 0.3
    boosts = jax.random.randint(
        k3, (T, B, 2, N_ACTIVE, N_BOOSTS), 0, N_BOOST_CLASSES)
    volatiles = (jax.random.uniform(
        k4, (T, B, 2, N_ACTIVE, N_VOLATILES)) > 0.5).astype(jnp.float32)
    scalar_emb = jax.random.normal(k5, (T, B, 2, ENTITY_DIM), jnp.float32)

    out = jax.jit(pallas_forward)(
        entity_embeddings, mask, boosts, volatiles, scalar_emb, params)
    out = jax.block_until_ready(out)

    ref = reference_forward(
        entity_embeddings, mask, boosts, volatiles, scalar_emb, params)
    assert out.shape == (TB, 2 * ENTITY_DIM), out.shape
    err = float(jnp.max(jnp.abs(out - ref)))
    assert jnp.allclose(out, ref, atol=2e-3, rtol=2e-3), err
    print("KERNEL_OK")
</pallas_src>

<mosaic_0001>
module attributes {stable_mosaic.version = 11 : i64} {
  func.func @_public_spatial_kernel(%arg0: i32, %arg1: memref<32x6x32xf32, #tpu.memory_space<vmem>>, %arg2: memref<32x2xf32, #tpu.memory_space<vmem>>, %arg3: memref<32x128xf32, #tpu.memory_space<vmem>>, %arg4: memref<32x32xf32, #tpu.memory_space<vmem>>, %arg5: memref<192x32xf32, #tpu.memory_space<vmem>>, %arg6: memref<2x32xf32, #tpu.memory_space<vmem>>, %arg7: memref<5x64x64xf32, #tpu.memory_space<vmem>>, %arg8: memref<5x64xf32, #tpu.memory_space<vmem>>, %arg9: memref<16x64xf32, #tpu.memory_space<vmem>>) attributes {dimension_semantics = [#tpu.dimension_semantics<arbitrary>], iteration_bounds = array<i64: 1>, scalar_prefetch = 0 : i64, scratch_operands = 0 : i64, tpu.core_type = #tpu.core_type<tc>, window_params = [{pipeline_mode = #tpu.pipeline_mode<synchronous>, transform_indices = @transform_0, window_bounds = array<i64: 32, 6, 32>}, {pipeline_mode = #tpu.pipeline_mode<synchronous>, transform_indices = @transform_1, window_bounds = array<i64: 32, 2>}, {pipeline_mode = #tpu.pipeline_mode<synchronous>, transform_indices = @transform_2, window_bounds = array<i64: 32, 128>}, {pipeline_mode = #tpu.pipeline_mode<synchronous>, transform_indices = @transform_3, window_bounds = array<i64: 32, 32>}, {pipeline_mode = #tpu.pipeline_mode<synchronous>, transform_indices = @transform_4, window_bounds = array<i64: 192, 32>}, {pipeline_mode = #tpu.pipeline_mode<synchronous>, transform_indices = @transform_5, window_bounds = array<i64: 2, 32>}, {pipeline_mode = #tpu.pipeline_mode<synchronous>, transform_indices = @transform_6, window_bounds = array<i64: 5, 64, 64>}, {pipeline_mode = #tpu.pipeline_mode<synchronous>, transform_indices = @transform_7, window_bounds = array<i64: 5, 64>}, {pipeline_mode = #tpu.pipeline_mode<synchronous>, transform_indices = @transform_8, window_bounds = array<i64: 16, 64>}]} {
    %c0 = arith.constant 0 : index
    %c0_0 = arith.constant 0 : index
    %c0_1 = arith.constant 0 : index
    %0 = vector.load %arg1[%c0, %c0_0, %c0_1] : memref<32x6x32xf32, #tpu.memory_space<vmem>>, vector<32x6x32xf32>
    %c0_2 = arith.constant 0 : index
    %c0_3 = arith.constant 0 : index
    %1 = vector.load %arg2[%c0_2, %c0_3] : memref<32x2xf32, #tpu.memory_space<vmem>>, vector<32x2xf32>
    %2 = vector.extract_strided_slice %0 {offsets = [0, 0, 0], sizes = [32, 1, 32], strides = [1, 1, 1]} : vector<32x6x32xf32> to vector<32x1x32xf32>
    %cst = arith.constant dense<0.000000e+00> : vector<32x32xf32>
    %3 = vector.multi_reduction <add>, %2, %cst [1] : vector<32x1x32xf32> to vector<32x32xf32>
    %4 = vector.extract_strided_slice %1 {offsets = [0, 0], sizes = [32, 1], strides = [1, 1]} : vector<32x2xf32> to vector<32x1xf32>
    %5 = vector.broadcast %4 : vector<32x1xf32> to vector<32x32xf32>
    %6 = arith.mulf %3, %5 : vector<32x32xf32>
    %7 = vector.extract_strided_slice %0 {offsets = [0, 1, 0], sizes = [32, 5, 32], strides = [1, 1, 1]} : vector<32x6x32xf32> to vector<32x5x32xf32>
    %cst_4 = arith.constant dense<0.000000e+00> : vector<32x32xf32>
    %8 = vector.multi_reduction <add>, %7, %cst_4 [1] : vector<32x5x32xf32> to vector<32x32xf32>
    %9 = vector.extract_strided_slice %1 {offsets = [0, 1], sizes = [32, 1], strides = [1, 1]} : vector<32x2xf32> to vector<32x1xf32>
    %10 = vector.broadcast %9 : vector<32x1xf32> to vector<32x32xf32>
    %11 = arith.mulf %8, %10 : vector<32x32xf32>
    %c0_5 = arith.constant 0 : index
    %c0_6 = arith.constant 0 : index
    %12 = vector.load %arg5[%c0_5, %c0_6] : memref<192x32xf32, #tpu.memory_space<vmem>>, vector<192x32xf32>
    %c0_7 = arith.constant 0 : index
    %c0_8 = arith.constant 0 : index
    %13 = vector.load %arg6[%c0_7, %c0_8] : memref<2x32xf32, #tpu.memory_space<vmem>>, vector<2x32xf32>
    %c0_9 = arith.constant 0 : index
    %c0_10 = arith.constant 0 : index
    %14 = vector.load %arg3[%c0_9, %c0_10] : memref<32x128xf32, #tpu.memory_space<vmem>>, vector<32x128xf32>
    %15 = vector.extract_strided_slice %12 {offsets = [0, 0], sizes = [128, 32], strides = [1, 1]} : vector<192x32xf32> to vector<128x32xf32>
    %cst_11 = arith.constant dense<0.000000e+00> : vector<32x32xf32>
    %16 = tpu.matmul %14, %15, %cst_11 {dimension_numbers = #tpu.dot_dimension_numbers<[1], [0], [0], [1], [0, 0, 1, 1], [], []>} : vector<32x128xf32>, vector<128x32xf32>, vector<32x32xf32> -> vector<32x32xf32>
    %17 = vector.extract_strided_slice %13 {offsets = [0, 0], sizes = [1, 32], strides = [1, 1]} : vector<2x32xf32> to vector<1x32xf32>
    %18 = vector.broadcast %17 : vector<1x32xf32> to vector<32x32xf32>
    %19 = arith.addf %16, %18 : vector<32x32xf32>
    %20 = arith.addf %6, %19 : vector<32x32xf32>
    %21 = vector.extract_strided_slice %12 {offsets = [128, 0], sizes = [32, 32], strides = [1, 1]} : vector<192x32xf32> to vector<32x32xf32>
    %cst_12 = arith.constant dense<0.000000e+00> : vector<32x32xf32>
    %22 = tpu.matmul %20, %21, %cst_12 {dimension_numbers = #tpu.dot_dimension_numbers<[1], [0], [0], [1], [0, 0, 1, 1], [], []>} : vector<32x32xf32>, vector<32x32xf32>, vector<32x32xf32> -> vector<32x32xf32>
    %23 = vector.extract_strided_slice %12 {offsets = [160, 0], sizes = [32, 32], strides = [1, 1]} : vector<192x32xf32> to vector<32x32xf32>
    %cst_13 = arith.constant dense<0.000000e+00> : vector<32x32xf32>
    %24 = tpu.matmul %11, %23, %cst_13 {dimension_numbers = #tpu.dot_dimension_numbers<[1], [0], [0], [1], [0, 0, 1, 1], [], []>} : vector<32x32xf32>, vector<32x32xf32>, vector<32x32xf32> -> vector<32x32xf32>
    %25 = arith.addf %22, %24 : vector<32x32xf32>
    %26 = vector.extract_strided_slice %13 {offsets = [1, 0], sizes = [1, 32], strides = [1, 1]} : vector<2x32xf32> to vector<1x32xf32>
    %27 = vector.broadcast %26 : vector<1x32xf32> to vector<32x32xf32>
    %28 = arith.addf %25, %27 : vector<32x32xf32>
    %c0_14 = arith.constant 0 : index
    %c0_15 = arith.constant 0 : index
    %29 = vector.load %arg4[%c0_14, %c0_15] : memref<32x32xf32, #tpu.memory_space<vmem>>, vector<32x32xf32>
    %30 = arith.addf %28, %29 : vector<32x32xf32>
    %31 = vector.extract_strided_slice %30 {offsets = [0, 0], sizes = [16, 32], strides = [1, 1]} : vector<32x32xf32> to vector<16x32xf32>
    %32 = vector.extract_strided_slice %30 {offsets = [16, 0], sizes = [16, 32], strides = [1, 1]} : vector<32x32xf32> to vector<16x32xf32>
    %33 = tpu.concatenate %31, %32 in 1 : vector<16x32xf32>, vector<16x32xf32> -> vector<16x64xf32>
    %c0_16 = arith.constant 0 : index
    %c0_17 = arith.constant 0 : index
    %c0_18 = arith.constant 0 : index
    %34 = vector.load %arg7[%c0_16, %c0_17, %c0_18] : memref<5x64x64xf32, #tpu.memory_space<vmem>>, vector<5x64x64xf32>
    %c0_19 = arith.constant 0 : index
    %c0_20 = arith.constant 0 : index
    %35 = vector.load %arg8[%c0_19, %c0_20] : memref<5x64xf32, #tpu.memory_space<vmem>>, vector<5x64xf32>
    %36 = vector.extract_strided_slice %34 {offsets = [0, 0, 0], sizes = [1, 64, 64], strides = [1, 1, 1]} : vector<5x64x64xf32> to vector<1x64x64xf32>
    %37 = vector.shape_cast %36 : vector<1x64x64xf32> to vector<64x64xf32>
    %38 = vector.extract_strided_slice %35 {offsets = [0, 0], sizes = [1, 64], strides = [1, 1]} : vector<5x64xf32> to vector<1x64xf32>
    %39 = vector.extract_strided_slice %34 {offsets = [1, 0, 0], sizes = [1, 64, 64], strides = [1, 1, 1]} : vector<5x64x64xf32> to vector<1x64x64xf32>
    %40 = vector.shape_cast %39 : vector<1x64x64xf32> to vector<64x64xf32>
    %41 = vector.extract_strided_slice %35 {offsets = [1, 0], sizes = [1, 64], strides = [1, 1]} : vector<5x64xf32> to vector<1x64xf32>
    %cst_21 = arith.constant dense<0.000000e+00> : vector<16x64xf32>
    %42 = tpu.matmul %33, %37, %cst_21 {dimension_numbers = #tpu.dot_dimension_numbers<[1], [0], [0], [1], [0, 0, 1, 1], [], []>} : vector<16x64xf32>, vector<64x64xf32>, vector<16x64xf32> -> vector<16x64xf32>
    %43 = vector.broadcast %38 : vector<1x64xf32> to vector<16x64xf32>
    %44 = arith.addf %42, %43 : vector<16x64xf32>
    %cst_22 = arith.constant 0.000000e+00 : f32
    %45 = vector.broadcast %cst_22 : f32 to vector<16x64xf32>
    %46 = arith.maximumf %44, %45 : vector<16x64xf32>
    %cst_23 = arith.constant dense<0.000000e+00> : vector<16x64xf32>
    %47 = tpu.matmul %46, %40, %cst_23 {dimension_numbers = #tpu.dot_dimension_numbers<[1], [0], [0], [1], [0, 0, 1, 1], [], []>} : vector<16x64xf32>, vector<64x64xf32>, vector<16x64xf32> -> vector<16x64xf32>
    %48 = arith.addf %33, %47 : vector<16x64xf32>
    %49 = vector.broadcast %41 : vector<1x64xf32> to vector<16x64xf32>
    %50 = arith.addf %48, %49 : vector<16x64xf32>
    %cst_24 = arith.constant 0.000000e+00 : f32
    %51 = vector.broadcast %cst_24 : f32 to vector<16x64xf32>
    %52 = arith.maximumf %50, %51 : vector<16x64xf32>
    %53 = vector.extract_strided_slice %34 {offsets = [2, 0, 0], sizes = [1, 64, 64], strides = [1, 1, 1]} : vector<5x64x64xf32> to vector<1x64x64xf32>
    %54 = vector.shape_cast %53 : vector<1x64x64xf32> to vector<64x64xf32>
    %55 = vector.extract_strided_slice %35 {offsets = [2, 0], sizes = [1, 64], strides = [1, 1]} : vector<5x64xf32> to vector<1x64xf32>
    %56 = vector.extract_strided_slice %34 {offsets = [3, 0, 0], sizes = [1, 64, 64], strides = [1, 1, 1]} : vector<5x64x64xf32> to vector<1x64x64xf32>
    %57 = vector.shape_cast %56 : vector<1x64x64xf32> to vector<64x64xf32>
    %58 = vector.extract_strided_slice %35 {offsets = [3, 0], sizes = [1, 64], strides = [1, 1]} : vector<5x64xf32> to vector<1x64xf32>
    %cst_25 = arith.constant dense<0.000000e+00> : vector<16x64xf32>
    %59 = tpu.matmul %52, %54, %cst_25 {dimension_numbers = #tpu.dot_dimension_numbers<[1], [0], [0], [1], [0, 0, 1, 1], [], []>} : vector<16x64xf32>, vector<64x64xf32>, vector<16x64xf32> -> vector<16x64xf32>
    %60 = vector.broadcast %55 : vector<1x64xf32> to vector<16x64xf32>
    %61 = arith.addf %59, %60 : vector<16x64xf32>
    %cst_26 = arith.constant 0.000000e+00 : f32
    %62 = vector.broadcast %cst_26 : f32 to vector<16x64xf32>
    %63 = arith.maximumf %61, %62 : vector<16x64xf32>
    %cst_27 = arith.constant dense<0.000000e+00> : vector<16x64xf32>
    %64 = tpu.matmul %63, %57, %cst_27 {dimension_numbers = #tpu.dot_dimension_numbers<[1], [0], [0], [1], [0, 0, 1, 1], [], []>} : vector<16x64xf32>, vector<64x64xf32>, vector<16x64xf32> -> vector<16x64xf32>
    %65 = arith.addf %52, %64 : vector<16x64xf32>
    %66 = vector.broadcast %58 : vector<1x64xf32> to vector<16x64xf32>
    %67 = arith.addf %65, %66 : vector<16x64xf32>
    %cst_28 = arith.constant 0.000000e+00 : f32
    %68 = vector.broadcast %cst_28 : f32 to vector<16x64xf32>
    %69 = arith.maximumf %67, %68 : vector<16x64xf32>
    %70 = vector.extract_strided_slice %34 {offsets = [4, 0, 0], sizes = [1, 64, 64], strides = [1, 1, 1]} : vector<5x64x64xf32> to vector<1x64x64xf32>
    %71 = vector.shape_cast %70 : vector<1x64x64xf32> to vector<64x64xf32>
    %cst_29 = arith.constant dense<0.000000e+00> : vector<16x64xf32>
    %72 = tpu.matmul %69, %71, %cst_29 {dimension_numbers = #tpu.dot_dimension_numbers<[1], [0], [0], [1], [0, 0, 1, 1], [], []>} : vector<16x64xf32>, vector<64x64xf32>, vector<16x64xf32> -> vector<16x64xf32>
    %73 = vector.extract_strided_slice %35 {offsets = [4, 0], sizes = [1, 64], strides = [1, 1]} : vector<5x64xf32> to vector<1x64xf32>
    %74 = vector.broadcast %73 : vector<1x64xf32> to vector<16x64xf32>
    %75 = arith.addf %72, %74 : vector<16x64xf32>
    %c0_30 = arith.constant 0 : index
    %c0_31 = arith.constant 0 : index
    %76 = vector.load %arg9[%c0_30, %c0_31] : memref<16x64xf32, #tpu.memory_space<vmem>>, vector<16x64xf32>
    tpu.vector_store %arg9[%c0_30, %c0_31], %75 {strides = array<i32>} : memref<16x64xf32, #tpu.memory_space<vmem>>, vector<16x64xf32>,
    return
  }
  func.func @transform_0(%arg0: i32) -> (i32, i32, i32) {
    %c0_i32 = arith.constant 0 : i32
    %c0_i32_0 = arith.constant 0 : i32
    %c0_i32_1 = arith.constant 0 : i32
    %c0_i32_2 = arith.constant 0 : i32
    return %c0_i32, %c0_i32_0, %c0_i32_1 : i32, i32, i32
  }
  func.func @transform_1(%arg0: i32) -> (i32, i32) {
    %c0_i32 = arith.constant 0 : i32
    %c0_i32_0 = arith.constant 0 : i32
    %c0_i32_1 = arith.constant 0 : i32
    return %c0_i32, %c0_i32_0 : i32, i32
  }
  func.func @transform_2(%arg0: i32) -> (i32, i32) {
    %c0_i32 = arith.constant 0 : i32
    %c0_i32_0 = arith.constant 0 : i32
    %c0_i32_1 = arith.constant 0 : i32
    return %c0_i32, %c0_i32_0 : i32, i32
  }
  func.func @transform_3(%arg0: i32) -> (i32, i32) {
    %c0_i32 = arith.constant 0 : i32
    %c0_i32_0 = arith.constant 0 : i32
    %c0_i32_1 = arith.constant 0 : i32
    return %c0_i32, %c0_i32_0 : i32, i32
  }
  func.func @transform_4(%arg0: i32) -> (i32, i32) {
    %c0_i32 = arith.constant 0 : i32
    %c0_i32_0 = arith.constant 0 : i32
    %c0_i32_1 = arith.constant 0 : i32
    return %c0_i32, %c0_i32_0 : i32, i32
  }
  func.func @transform_5(%arg0: i32) -> (i32, i32) {
    %c0_i32 = arith.constant 0 : i32
    %c0_i32_0 = arith.constant 0 : i32
    %c0_i32_1 = arith.constant 0 : i32
    return %c0_i32, %c0_i32_0 : i32, i32
  }
  func.func @transform_6(%arg0: i32) -> (i32, i32, i32) {
    %c0_i32 = arith.constant 0 : i32
    %c0_i32_0 = arith.constant 0 : i32
    %c0_i32_1 = arith.constant 0 : i32
    %c0_i32_2 = arith.constant 0 : i32
    return %c0_i32, %c0_i32_0, %c0_i32_1 : i32, i32, i32
  }
  func.func @transform_7(%arg0: i32) -> (i32, i32) {
    %c0_i32 = arith.constant 0 : i32
    %c0_i32_0 = arith.constant 0 : i32
    %c0_i32_1 = arith.constant 0 : i32
    return %c0_i32, %c0_i32_0 : i32, i32
  }
  func.func @transform_8(%arg0: i32) -> (i32, i32) {
    %c0_i32 = arith.constant 0 : i32
    %c0_i32_0 = arith.constant 0 : i32
    %c0_i32_1 = arith.constant 0 : i32
    return %c0_i32, %c0_i32_0 : i32, i32
  }
}

</mosaic_0001>

<llo_original>
// kernel: pallas_forward.1
$region0: #{pallas_forward.1}
  #allocation0 [shape = 'u32[]', space=smem, size = 0x4, offset = 0x4, fixed_abs, tag = 'smem constant byte address 0x4 - core index']
  #allocation1 [shape = 'u32[144,128]{1,0:T(1,128)}', space=vmem, size = 0x12000, scoped, tag = 'internal scratch']
  %s0 = inlined_call_operand.vmem [shape: f32[32,6,32], index: 0, kind: input, shape index: {}]
  %s1 = inlined_call_operand.vmem [shape: f32[32,2], index: 1, kind: input, shape index: {}]
  %s2 = inlined_call_operand.vmem [shape: f32[32,128], index: 2, kind: input, shape index: {}]
  %s3 = inlined_call_operand.vmem [shape: f32[32,32], index: 3, kind: input, shape index: {}]
  %s4 = inlined_call_operand.vmem [shape: f32[192,32], index: 4, kind: input, shape index: {}]
  %s5 = inlined_call_operand.vmem [shape: f32[2,32], index: 5, kind: input, shape index: {}]
  %s6 = inlined_call_operand.vmem [shape: f32[5,64,64], index: 6, kind: input, shape index: {}]
  %s7 = inlined_call_operand.vmem [shape: f32[5,64], index: 7, kind: input, shape index: {}]
  %s8 = inlined_call_operand.hbm [shape: f32[16,64], index: 8, kind: output, shape index: {}]
  %s9 = sld [smem:[#allocation0]]
  $region42: #{pallas_forward.1} parent=0
    _
  %s11 = ssub.s32 1, %s9
  %s12 = scalar_select 0, %s11, %s9
  $region1: #{pallas_forward.1} parent=0
    #allocation2 [shape = 'u8[8192]{0}', space=vmem, size = 0x2000, scoped, tag = 'output window, operand 0, single buffered']
    #allocation3 [shape = 's32[1]{0}', space=sflag, size = 0x4, scoped, tag = 'scoped memory for pallas_forward.1']
    %13 = vsyncpa [#allocation3], 0
    // Predicated region
    $region2: #{pallas_forward.1} parent=1 // pred_check
      _
    $region3: #{pallas_forward.1} parent=1 // pred_check_branch
      %15 = sbr.rel (0) target = $region5
    $region4: #{pallas_forward.1} parent=1 // pred_region
      _
    $region5: #{pallas_forward.1} parent=1 // pred_fallthru
      _
    // Predicated region
    $region6: #{pallas_forward.1} parent=1 // pred_check
      _
    $region7: #{pallas_forward.1} parent=1 // pred_check_branch
      %17 = sbr.rel (0) target = $region9
    $region8: #{pallas_forward.1} parent=1 // pred_region
      _
    $region9: #{pallas_forward.1} parent=1 // pred_fallthru
      _
    // Predicated region
    $region10: #{pallas_forward.1} parent=1 // pred_check
      _
    $region11: #{pallas_forward.1} parent=1 // pred_check_branch
      %19 = sbr.rel (0) target = $region13
    $region12: #{pallas_forward.1} parent=1 // pred_region
      _
    $region13: #{pallas_forward.1} parent=1 // pred_fallthru
      _
    // Predicated region
    $region14: #{pallas_forward.1} parent=1 // pred_check
      _
    $region15: #{pallas_forward.1} parent=1 // pred_check_branch
      %21 = sbr.rel (0) target = $region17
    $region16: #{pallas_forward.1} parent=1 // pred_region
      _
    $region17: #{pallas_forward.1} parent=1 // pred_fallthru
      _
    // Predicated region
    $region18: #{pallas_forward.1} parent=1 // pred_check
      _
    $region19: #{pallas_forward.1} parent=1 // pred_check_branch
      %23 = sbr.rel (0) target = $region21
    $region20: #{pallas_forward.1} parent=1 // pred_region
      _
    $region21: #{pallas_forward.1} parent=1 // pred_fallthru
      _
    // Predicated region
    $region22: #{pallas_forward.1} parent=1 // pred_check
      _
    $region23: #{pallas_forward.1} parent=1 // pred_check_branch
      %25 = sbr.rel (0) target = $region25
    $region24: #{pallas_forward.1} parent=1 // pred_region
      _
    $region25: #{pallas_forward.1} parent=1 // pred_fallthru
      _
    // Predicated region
    $region26: #{pallas_forward.1} parent=1 // pred_check
      _
    $region27: #{pallas_forward.1} parent=1 // pred_check_branch
      %27 = sbr.rel (0) target = $region29
    $region28: #{pallas_forward.1} parent=1 // pred_region
      _
    $region29: #{pallas_forward.1} parent=1 // pred_fallthru
      _
    // Predicated region
    $region30: #{pallas_forward.1} parent=1 // pred_check
      _
    $region31: #{pallas_forward.1} parent=1 // pred_check_branch
      %29 = sbr.rel (0) target = $region33
    $region32: #{pallas_forward.1} parent=1 // pred_region
      _
    $region33: #{pallas_forward.1} parent=1 // pred_fallthru
      _
    %v30 = vld [vmem:[%s0] sm:$0x3f]
    %v31 = vld [vmem:[%s0 + $0x8] sm:$0x3f]
    %v32 = vld [vmem:[%s0 + $0x10] sm:$0x3f]
    %v33 = vld [vmem:[%s0 + $0x18] sm:$0x3f]
    %v34 = vld [vmem:[%s0 + $0x20] sm:$0x3f]
    %v35 = vld [vmem:[%s0 + $0x28] sm:$0x3f]
    %v36 = vld [vmem:[%s0 + $0x30] sm:$0x3f]
    %v37 = vld [vmem:[%s0 + $0x38] sm:$0x3f]
    %v38 = vld [vmem:[%s0 + $0x40] sm:$0x3f]
    %v39 = vld [vmem:[%s0 + $0x48] sm:$0x3f]
    %v40 = vld [vmem:[%s0 + $0x50] sm:$0x3f]
    %v41 = vld [vmem:[%s0 + $0x58] sm:$0x3f]
    %v42 = vld [vmem:[%s0 + $0x60] sm:$0x3f]
    %v43 = vld [vmem:[%s0 + $0x68] sm:$0x3f]
    %v44 = vld [vmem:[%s0 + $0x70] sm:$0x3f]
    %v45 = vld [vmem:[%s0 + $0x78] sm:$0x3f]
    %v46 = vld [vmem:[%s0 + $0x80] sm:$0x3f]
    %v47 = vld [vmem:[%s0 + $0x88] sm:$0x3f]
    %v48 = vld [vmem:[%s0 + $0x90] sm:$0x3f]
    %v49 = vld [vmem:[%s0 + $0x98] sm:$0x3f]
    %v50 = vld [vmem:[%s0 + $0xa0] sm:$0x3f]
    %v51 = vld [vmem:[%s0 + $0xa8] sm:$0x3f]
    %v52 = vld [vmem:[%s0 + $0xb0] sm:$0x3f]
    %v53 = vld [vmem:[%s0 + $0xb8] sm:$0x3f]
    %v54 = vld [vmem:[%s0 + $0xc0] sm:$0x3f]
    %v55 = vld [vmem:[%s0 + $0xc8] sm:$0x3f]
    %v56 = vld [vmem:[%s0 + $0xd0] sm:$0x3f]
    %v57 = vld [vmem:[%s0 + $0xd8] sm:$0x3f]
    %v58 = vld [vmem:[%s0 + $0xe0] sm:$0x3f]
    %v59 = vld [vmem:[%s0 + $0xe8] sm:$0x3f]
    %v60 = vld [vmem:[%s0 + $0xf0] sm:$0x3f]
    %v61 = vld [vmem:[%s0 + $0xf8] sm:$0x3f]
    %v62 = vld [vmem:[%s1] sm:$0xff]
    %v63 = vld [vmem:[%s1 + $0x8] sm:$0xff]
    %v64 = vld [vmem:[%s1 + $0x10] sm:$0xff]
    %v65 = vld [vmem:[%s1 + $0x18] sm:$0xff]
    %v66 = vadd.f32 %v30, 0.0
    %v67 = vadd.f32 %v31, 0.0
    %v68 = vadd.f32 %v32, 0.0
    %v69 = vadd.f32 %v33, 0.0
    %v70 = vadd.f32 %v34, 0.0
    %v71 = vadd.f32 %v35, 0.0
    %v72 = vadd.f32 %v36, 0.0
    %v73 = vadd.f32 %v37, 0.0
    %v74 = vadd.f32 %v38, 0.0
    %v75 = vadd.f32 %v39, 0.0
    %v76 = vadd.f32 %v40, 0.0
    %v77 = vadd.f32 %v41, 0.0
    %v78 = vadd.f32 %v42, 0.0
    %v79 = vadd.f32 %v43, 0.0
    %v80 = vadd.f32 %v44, 0.0
    %v81 = vadd.f32 %v45, 0.0
    %v82 = vadd.f32 %v46, 0.0
    %v83 = vadd.f32 %v47, 0.0
    %v84 = vadd.f32 %v48, 0.0
    %v85 = vadd.f32 %v49, 0.0
    %v86 = vadd.f32 %v50, 0.0
    %v87 = vadd.f32 %v51, 0.0
    %v88 = vadd.f32 %v52, 0.0
    %v89 = vadd.f32 %v53, 0.0
    %v90 = vadd.f32 %v54, 0.0
    %v91 = vadd.f32 %v55, 0.0
    %v92 = vadd.f32 %v56, 0.0
    %v93 = vadd.f32 %v57, 0.0
    %v94 = vadd.f32 %v58, 0.0
    %v95 = vadd.f32 %v59, 0.0
    %v96 = vadd.f32 %v60, 0.0
    %v97 = vadd.f32 %v61, 0.0
    %99 = vset.pattern.permute.xlu0 0
    %100 = vperm.xlu0 %99, %v62
    %v101 = vpop.permute.xlu0 %100
    %103 = vset.pattern.permute.xlu0 0
    %104 = vperm.xlu0 %103, %v63
    %v105 = vpop.permute.xlu0 %104
    %107 = vset.pattern.permute.xlu0 0
    %108 = vperm.xlu0 %107, %v64
    %v109 = vpop.permute.xlu0 %108
    %111 = vset.pattern.permute.xlu0 0
    %112 = vperm.xlu0 %111, %v65
    %v113 = vpop.permute.xlu0 %112
    %v114 = vrot.slane %v101, 1
    %v115 = vrot.slane %v101, 2
    %v116 = vrot.slane %v101, 3
    %v117 = vrot.slane %v101, 4
    %v118 = vrot.slane %v101, 5
    %v119 = vrot.slane %v101, 6
    %v120 = vrot.slane %v101, 7
    %v121 = vrot.slane %v105, 1
    %v122 = vrot.slane %v105, 2
    %v123 = vrot.slane %v105, 3
    %v124 = vrot.slane %v105, 4
    %v125 = vrot.slane %v105, 5
    %v126 = vrot.slane %v105, 6
    %v127 = vrot.slane %v105, 7
    %v128 = vrot.slane %v109, 1
    %v129 = vrot.slane %v109, 2
    %v130 = vrot.slane %v109, 3
    %v131 = vrot.slane %v109, 4
    %v132 = vrot.slane %v109, 5
    %v133 = vrot.slane %v109, 6
    %v134 = vrot.slane %v109, 7
    %v135 = vrot.slane %v113, 1
    %v136 = vrot.slane %v113, 2
    %v137 = vrot.slane %v113, 3
    %v138 = vrot.slane %v113, 4
    %v139 = vrot.slane %v113, 5
    %v140 = vrot.slane %v113, 6
    %v141 = vrot.slane %v113, 7
    %v174 = vmul.f32 %v66, %v101
    %v175 = vmul.f32 %v67, %v114
    %v176 = vmul.f32 %v68, %v115
    %v177 = vmul.f32 %v69, %v116
    %v178 = vmul.f32 %v70, %v117
    %v179 = vmul.f32 %v71, %v118
    %v180 = vmul.f32 %v72, %v119
    %v181 = vmul.f32 %v73, %v120
    %v182 = vmul.f32 %v74, %v105
    %v183 = vmul.f32 %v75, %v121
    %v184 = vmul.f32 %v76, %v122
    %v185 = vmul.f32 %v77, %v123
    %v186 = vmul.f32 %v78, %v124
    %v187 = vmul.f32 %v79, %v125
    %v188 = vmul.f32 %v80, %v126
    %v189 = vmul.f32 %v81, %v127
    %v190 = vmul.f32 %v82, %v109
    %v191 = vmul.f32 %v83, %v128
    %v192 = vmul.f32 %v84, %v129
    %v193 = vmul.f32 %v85, %v130
    %v194 = vmul.f32 %v86, %v131
    %v195 = vmul.f32 %v87, %v132
    %v196 = vmul.f32 %v88, %v133
    %v197 = vmul.f32 %v89, %v134
    %v198 = vmul.f32 %v90, %v113
    %v199 = vmul.f32 %v91, %v135
    %v200 = vmul.f32 %v92, %v136
    %v201 = vmul.f32 %v93, %v137
    %v202 = vmul.f32 %v94, %v138
    %v203 = vmul.f32 %v95, %v139
    %v204 = vmul.f32 %v96, %v140
    %v205 = vmul.f32 %v97, %v141
    %v238 = vrot.slane %v30, 1
    %v239 = vrot.slane %v31, 1
    %v240 = vrot.slane %v32, 1
    %v241 = vrot.slane %v33, 1
    %v242 = vrot.slane %v34, 1
    %v243 = vrot.slane %v35, 1
    %v244 = vrot.slane %v36, 1
    %v245 = vrot.slane %v37, 1
    %v246 = vrot.slane %v38, 1
    %v247 = vrot.slane %v39, 1
    %v248 = vrot.slane %v40, 1
    %v249 = vrot.slane %v41, 1
    %v250 = vrot.slane %v42, 1
    %v251 = vrot.slane %v43, 1
    %v252 = vrot.slane %v44, 1
    %v253 = vrot.slane %v45, 1
    %v254 = vrot.slane %v46, 1
    %v255 = vrot.slane %v47, 1
    %v256 = vrot.slane %v48, 1
    %v257 = vrot.slane %v49, 1
    %v258 = vrot.slane %v50, 1
    %v259 = vrot.slane %v51, 1
    %v260 = vrot.slane %v52, 1
    %v261 = vrot.slane %v53, 1
    %v262 = vrot.slane %v54, 1
    %v263 = vrot.slane %v55, 1
    %v264 = vrot.slane %v56, 1
    %v265 = vrot.slane %v57, 1
    %v266 = vrot.slane %v58, 1
    %v267 = vrot.slane %v59, 1
    %v268 = vrot.slane %v60, 1
    %v269 = vrot.slane %v61, 1
    %vm302 = vcmask 258048
    %v303 = vsel %vm302, %v238, 0.0
    %v304 = vrot.slane %v303, 4
    %v305 = vadd.f32 %v303, %v304
    %v306 = vrot.slane %v305, 2
    %v307 = vadd.f32 %v305, %v306
    %v308 = vrot.slane %v307, 1
    %v309 = vadd.f32 %v307, %v308
    %v310 = vsel %vm302, %v239, 0.0
    %v311 = vrot.slane %v310, 4
    %v312 = vadd.f32 %v310, %v311
    %v313 = vrot.slane %v312, 2
    %v314 = vadd.f32 %v312, %v313
    %v315 = vrot.slane %v314, 1
    %v316 = vadd.f32 %v314, %v315
    %v317 = vsel %vm302, %v240, 0.0
    %v318 = vrot.slane %v317, 4
    %v319 = vadd.f32 %v317, %v318
    %v320 = vrot.slane %v319, 2
    %v321 = vadd.f32 %v319, %v320
    %v322 = vrot.slane %v321, 1
    %v323 = vadd.f32 %v321, %v322
    %v324 = vsel %vm302, %v241, 0.0
    %v325 = vrot.slane %v324, 4
    %v326 = vadd.f32 %v324, %v325
    %v327 = vrot.slane %v326, 2
    %v328 = vadd.f32 %v326, %v327
    %v329 = vrot.slane %v328, 1
    %v330 = vadd.f32 %v328, %v329
    %v331 = vsel %vm302, %v242, 0.0
    %v332 = vrot.slane %v331, 4
    %v333 = vadd.f32 %v331, %v332
    %v334 = vrot.slane %v333, 2
    %v335 = vadd.f32 %v333, %v334
    %v336 = vrot.slane %v335, 1
    %v337 = vadd.f32 %v335, %v336
    %v338 = vsel %vm302, %v243, 0.0
    %v339 = vrot.slane %v338, 4
    %v340 = vadd.f32 %v338, %v339
    %v341 = vrot.slane %v340, 2
    %v342 = vadd.f32 %v340, %v341
    %v343 = vrot.slane %v342, 1
    %v344 = vadd.f32 %v342, %v343
    %v345 = vsel %vm302, %v244, 0.0
    %v346 = vrot.slane %v345, 4
    %v347 = vadd.f32 %v345, %v346
    %v348 = vrot.slane %v347, 2
    %v349 = vadd.f32 %v347, %v348
    %v350 = vrot.slane %v349, 1
    %v351 = vadd.f32 %v349, %v350
    %v352 = vsel %vm302, %v245, 0.0
    %v353 = vrot.slane %v352, 4
    %v354 = vadd.f32 %v352, %v353
    %v355 = vrot.slane %v354, 2
    %v356 = vadd.f32 %v354, %v355
    %v357 = vrot.slane %v356, 1
    %v358 = vadd.f32 %v356, %v357
    %v359 = vsel %vm302, %v246, 0.0
    %v360 = vrot.slane %v359, 4
    %v361 = vadd.f32 %v359, %v360
    %v362 = vrot.slane %v361, 2
    %v363 = vadd.f32 %v361, %v362
    %v364 = vrot.slane %v363, 1
    %v365 = vadd.f32 %v363, %v364
    %v366 = vsel %vm302, %v247, 0.0
    %v367 = vrot.slane %v366, 4
    %v368 = vadd.f32 %v366, %v367
    %v369 = vrot.slane %v368, 2
    %v370 = vadd.f32 %v368, %v369
    %v371 = vrot.slane %v370, 1
    %v372 = vadd.f32 %v370, %v371
    %v373 = vsel %vm302, %v248, 0.0
    %v374 = vrot.slane %v373, 4
    %v375 = vadd.f32 %v373, %v374
    %v376 = vrot.slane %v375, 2
    %v377 = vadd.f32 %v375, %v376
    %v378 = vrot.slane %v377, 1
    %v379 = vadd.f32 %v377, %v378
    %v380 = vsel %vm302, %v249, 0.0
    %v381 = vrot.slane %v380, 4
    %v382 = vadd.f32 %v380, %v381
    %v383 = vrot.slane %v382, 2
    %v384 = vadd.f32 %v382, %v383
    %v385 = vrot.slane %v384, 1
    %v386 = vadd.f32 %v384, %v385
    %v387 = vsel %vm302, %v250, 0.0
    %v388 = vrot.slane %v387, 4
    %v389 = vadd.f32 %v387, %v388
    %v390 = vrot.slane %v389, 2
    %v391 = vadd.f32 %v389, %v390
    %v392 = vrot.slane %v391, 1
    %v393 = vadd.f32 %v391, %v392
    %v394 = vsel %vm302, %v251, 0.0
    %v395 = vrot.slane %v394, 4
    %v396 = vadd.f32 %v394, %v395
    %v397 = vrot.slane %v396, 2
    %v398 = vadd.f32 %v396, %v397
    %v399 = vrot.slane %v398, 1
    %v400 = vadd.f32 %v398, %v399
    %v401 = vsel %vm302, %v252, 0.0
    %v402 = vrot.slane %v401, 4
    %v403 = vadd.f32 %v401, %v402
    %v404 = vrot.slane %v403, 2
    %v405 = vadd.f32 %v403, %v404
    %v406 = vrot.slane %v405, 1
    %v407 = vadd.f32 %v405, %v406
    %v408 = vsel %vm302, %v253, 0.0
    %v409 = vrot.slane %v408, 4
    %v410 = vadd.f32 %v408, %v409
    %v411 = vrot.slane %v410, 2
    %v412 = vadd.f32 %v410, %v411
    %v413 = vrot.slane %v412, 1
    %v414 = vadd.f32 %v412, %v413
    %v415 = vsel %vm302, %v254, 0.0
    %v416 = vrot.slane %v415, 4
    %v417 = vadd.f32 %v415, %v416
    %v418 = vrot.slane %v417, 2
    %v419 = vadd.f32 %v417, %v418
    %v420 = vrot.slane %v419, 1
    %v421 = vadd.f32 %v419, %v420
    %v422 = vsel %vm302, %v255, 0.0
    %v423 = vrot.slane %v422, 4
    %v424 = vadd.f32 %v422, %v423
    %v425 = vrot.slane %v424, 2
    %v426 = vadd.f32 %v424, %v425
    %v427 = vrot.slane %v426, 1
    %v428 = vadd.f32 %v426, %v427
    %v429 = vsel %vm302, %v256, 0.0
    %v430 = vrot.slane %v429, 4
    %v431 = vadd.f32 %v429, %v430
    %v432 = vrot.slane %v431, 2
    %v433 = vadd.f32 %v431, %v432
    %v434 = vrot.slane %v433, 1
    %v435 = vadd.f32 %v433, %v434
    %v436 = vsel %vm302, %v257, 0.0
    %v437 = vrot.slane %v436, 4
    %v438 = vadd.f32 %v436, %v437
    %v439 = vrot.slane %v438, 2
    %v440 = vadd.f32 %v438, %v439
    %v441 = vrot.slane %v440, 1
    %v442 = vadd.f32 %v440, %v441
    %v443 = vsel %vm302, %v258, 0.0
    %v444 = vrot.slane %v443, 4
    %v445 = vadd.f32 %v443, %v444
    %v446 = vrot.slane %v445, 2
    %v447 = vadd.f32 %v445, %v446
    %v448 = vrot.slane %v447, 1
    %v449 = vadd.f32 %v447, %v448
    %v450 = vsel %vm302, %v259, 0.0
    %v451 = vrot.slane %v450, 4
    %v452 = vadd.f32 %v450, %v451
    %v453 = vrot.slane %v452, 2
    %v454 = vadd.f32 %v452, %v453
    %v455 = vrot.slane %v454, 1
    %v456 = vadd.f32 %v454, %v455
    %v457 = vsel %vm302, %v260, 0.0
    %v458 = vrot.slane %v457, 4
    %v459 = vadd.f32 %v457, %v458
    %v460 = vrot.slane %v459, 2
    %v461 = vadd.f32 %v459, %v460
    %v462 = vrot.slane %v461, 1
    %v463 = vadd.f32 %v461, %v462
    %v464 = vsel %vm302, %v261, 0.0
    %v465 = vrot.slane %v464, 4
    %v466 = vadd.f32 %v464, %v465
    %v467 = vrot.slane %v466, 2
    %v468 = vadd.f32 %v466, %v467
    %v469 = vrot.slane %v468, 1
    %v470 = vadd.f32 %v468, %v469
    %v471 = vsel %vm302, %v262, 0.0
    %v472 = vrot.slane %v471, 4
    %v473 = vadd.f32 %v471, %v472
    %v474 = vrot.slane %v473, 2
    %v475 = vadd.f32 %v473, %v474
    %v476 = vrot.slane %v475, 1
    %v477 = vadd.f32 %v475, %v476
    %v478 = vsel %vm302, %v263, 0.0
    %v479 = vrot.slane %v478, 4
    %v480 = vadd.f32 %v478, %v479
    %v481 = vrot.slane %v480, 2
    %v482 = vadd.f32 %v480, %v481
    %v483 = vrot.slane %v482, 1
    %v484 = vadd.f32 %v482, %v483
    %v485 = vsel %vm302, %v264, 0.0
    %v486 = vrot.slane %v485, 4
    %v487 = vadd.f32 %v485, %v486
    %v488 = vrot.slane %v487, 2
    %v489 = vadd.f32 %v487, %v488
    %v490 = vrot.slane %v489, 1
    %v491 = vadd.f32 %v489, %v490
    %v492 = vsel %vm302, %v265, 0.0
    %v493 = vrot.slane %v492, 4
    %v494 = vadd.f32 %v492, %v493
    %v495 = vrot.slane %v494, 2
    %v496 = vadd.f32 %v494, %v495
    %v497 = vrot.slane %v496, 1
    %v498 = vadd.f32 %v496, %v497
    %v499 = vsel %vm302, %v266, 0.0
    %v500 = vrot.slane %v499, 4
    %v501 = vadd.f32 %v499, %v500
    %v502 = vrot.slane %v501, 2
    %v503 = vadd.f32 %v501, %v502
    %v504 = vrot.slane %v503, 1
    %v505 = vadd.f32 %v503, %v504
    %v506 = vsel %vm302, %v267, 0.0
    %v507 = vrot.slane %v506, 4
    %v508 = vadd.f32 %v506, %v507
    %v509 = vrot.slane %v508, 2
    %v510 = vadd.f32 %v508, %v509
    %v511 = vrot.slane %v510, 1
    %v512 = vadd.f32 %v510, %v511
    %v513 = vsel %vm302, %v268, 0.0
    %v514 = vrot.slane %v513, 4
    %v515 = vadd.f32 %v513, %v514
    %v516 = vrot.slane %v515, 2
    %v517 = vadd.f32 %v515, %v516
    %v518 = vrot.slane %v517, 1
    %v519 = vadd.f32 %v517, %v518
    %v520 = vsel %vm302, %v269, 0.0
    %v521 = vrot.slane %v520, 4
    %v522 = vadd.f32 %v520, %v521
    %v523 = vrot.slane %v522, 2
    %v524 = vadd.f32 %v522, %v523
    %v525 = vrot.slane %v524, 1
    %v526 = vadd.f32 %v524, %v525
    %527 = vset.pattern.permute.xlu0 1
    %528 = vperm.xlu0 %527, %v62
    %v529 = vpop.permute.xlu0 %528
    %530 = vset.pattern.permute.xlu0 1
    %531 = vperm.xlu0 %530, %v63
    %v532 = vpop.permute.xlu0 %531
    %533 = vset.pattern.permute.xlu0 1
    %534 = vperm.xlu0 %533, %v64
    %v535 = vpop.permute.xlu0 %534
    %536 = vset.pattern.permute.xlu0 1
    %537 = vperm.xlu0 %536, %v65
    %v538 = vpop.permute.xlu0 %537
    %v539 = vrot.slane %v529, 1
    %v540 = vrot.slane %v529, 2
    %v541 = vrot.slane %v529, 3
    %v542 = vrot.slane %v529, 4
    %v543 = vrot.slane %v529, 5
    %v544 = vrot.slane %v529, 6
    %v545 = vrot.slane %v529, 7
    %v546 = vrot.slane %v532, 1
    %v547 = vrot.slane %v532, 2
    %v548 = vrot.slane %v532, 3
    %v549 = vrot.slane %v532, 4
    %v550 = vrot.slane %v532, 5
    %v551 = vrot.slane %v532, 6
    %v552 = vrot.slane %v532, 7
    %v553 = vrot.slane %v535, 1
    %v554 = vrot.slane %v535, 2
    %v555 = vrot.slane %v535, 3
    %v556 = vrot.slane %v535, 4
    %v557 = vrot.slane %v535, 5
    %v558 = vrot.slane %v535, 6
    %v559 = vrot.slane %v535, 7
    %v560 = vrot.slane %v538, 1
    %v561 = vrot.slane %v538, 2
    %v562 = vrot.slane %v538, 3
    %v563 = vrot.slane %v538, 4
    %v564 = vrot.slane %v538, 5
    %v565 = vrot.slane %v538, 6
    %v566 = vrot.slane %v538, 7
    %v599 = vmul.f32 %v309, %v529
    %v600 = vmul.f32 %v316, %v539
    %v601 = vmul.f32 %v323, %v540
    %v602 = vmul.f32 %v330, %v541
    %v603 = vmul.f32 %v337, %v542
    %v604 = vmul.f32 %v344, %v543
    %v605 = vmul.f32 %v351, %v544
    %v606 = vmul.f32 %v358, %v545
    %v607 = vmul.f32 %v365, %v532
    %v608 = vmul.f32 %v372, %v546
    %v609 = vmul.f32 %v379, %v547
    %v610 = vmul.f32 %v386, %v548
    %v611 = vmul.f32 %v393, %v549
    %v612 = vmul.f32 %v400, %v550
    %v613 = vmul.f32 %v407, %v551
    %v614 = vmul.f32 %v414, %v552
    %v615 = vmul.f32 %v421, %v535
    %v616 = vmul.f32 %v428, %v553
    %v617 = vmul.f32 %v435, %v554
    %v618 = vmul.f32 %v442, %v555
    %v619 = vmul.f32 %v449, %v556
    %v620 = vmul.f32 %v456, %v557
    %v621 = vmul.f32 %v463, %v558
    %v622 = vmul.f32 %v470, %v559
    %v623 = vmul.f32 %v477, %v538
    %v624 = vmul.f32 %v484, %v560
    %v625 = vmul.f32 %v491, %v561
    %v626 = vmul.f32 %v498, %v562
    %v627 = vmul.f32 %v505, %v563
    %v628 = vmul.f32 %v512, %v564
    %v629 = vmul.f32 %v519, %v565
    %v630 = vmul.f32 %v526, %v566
    %v631 = vld [vmem:[%s4] sm:$0xff]
    %v632 = vld [vmem:[%s4 + $0x8] sm:$0xff]
    %v633 = vld [vmem:[%s4 + $0x10] sm:$0xff]
    %v634 = vld [vmem:[%s4 + $0x18] sm:$0xff]
    %v635 = vld [vmem:[%s4 + $0x20] sm:$0xff]
    %v636 = vld [vmem:[%s4 + $0x28] sm:$0xff]
    %v637 = vld [vmem:[%s4 + $0x30] sm:$0xff]
    %v638 = vld [vmem:[%s4 + $0x38] sm:$0xff]
    %v639 = vld [vmem:[%s4 + $0x40] sm:$0xff]
    %v640 = vld [vmem:[%s4 + $0x48] sm:$0xff]
    %v641 = vld [vmem:[%s4 + $0x50] sm:$0xff]
    %v642 = vld [vmem:[%s4 + $0x58] sm:$0xff]
    %v643 = vld [vmem:[%s4 + $0x60] sm:$0xff]
    %v644 = vld [vmem:[%s4 + $0x68] sm:$0xff]
    %v645 = vld [vmem:[%s4 + $0x70] sm:$0xff]
    %v646 = vld [vmem:[%s4 + $0x78] sm:$0xff]
    %v647 = vld [vmem:[%s4 + $0x80] sm:$0xff]
    %v648 = vld [vmem:[%s4 + $0x88] sm:$0xff]
    %v649 = vld [vmem:[%s4 + $0x90] sm:$0xff]
    %v650 = vld [vmem:[%s4 + $0x98] sm:$0xff]
    %v651 = vld [vmem:[%s4 + $0xa0] sm:$0xff]
    %v652 = vld [vmem:[%s4 + $0xa8] sm:$0xff]
    %v653 = vld [vmem:[%s4 + $0xb0] sm:$0xff]
    %v654 = vld [vmem:[%s4 + $0xb8] sm:$0xff]
    %v655 = vld [vmem:[%s5] sm:$0x3]
    %v656 = vld [vmem:[%s2] sm:$0xff]
    %v657 = vld [vmem:[%s2 + $0x8] sm:$0xff]
    %v658 = vld [vmem:[%s2 + $0x10] sm:$0xff]
    %v659 = vld [vmem:[%s2 + $0x18] sm:$0xff]
    %v660 = vlaneseq
    %v661 = vshrl.u32 %v660, 7
    %v662 = vsub.s32 0, %v661
    %v663 = vrot.slane %v655, %v662
    %664 = vmatprep.subr.mxu0 0.0
    %665 = vmatpush1.msra.mxu0 %v631
    %666 = vmatprep.subr.mxu0 0.0
    %667 = vmatpush1.msra.mxu0 %v632
    %668 = vmatprep.subr.mxu0 0.0
    %669 = vmatpush1.msra.mxu0 %v633
    %670 = vmatprep.subr.mxu0 0.0
    %671 = vmatpush1.msra.mxu0 %v634
    %672 = vmatprep.subr.mxu0 0.0
    %673 = vmatpush1.msra.mxu0 %v635
    %674 = vmatprep.subr.mxu0 0.0
    %675 = vmatpush1.msra.mxu0 %v636
    %676 = vmatprep.subr.mxu0 0.0
    %677 = vmatpush1.msra.mxu0 %v637
    %678 = vmatprep.subr.mxu0 0.0
    %679 = vmatpush1.msra.mxu0 %v638
    %680 = vmatprep.subr.mxu0 0.0
    %681 = vmatpush1.msra.mxu0 %v639
    %682 = vmatprep.subr.mxu0 0.0
    %683 = vmatpush1.msra.mxu0 %v640
    %684 = vmatprep.subr.mxu0 0.0
    %685 = vmatpush1.msra.mxu0 %v641
    %686 = vmatprep.subr.mxu0 0.0
    %687 = vmatpush1.msra.mxu0 %v642
    %688 = vmatprep.subr.mxu0 0.0
    %689 = vmatpush1.msra.mxu0 %v643
    %690 = vmatprep.subr.mxu0 0.0
    %691 = vmatpush1.msra.mxu0 %v644
    %692 = vmatprep.subr.mxu0 0.0
    %693 = vmatpush1.msra.mxu0 %v645
    %694 = vmatprep.subr.mxu0 0.0
    %695 = vmatpush1.msra.mxu0 %v646
    %696 = vmatprep.subr.mxu0 0.0
    %697 = vmatpush1.msra.mxu0 0.0
    %698 = vmatprep.subr.mxu0 0.0
    %699 = vmatpush1.msra.mxu0 0.0
    %700 = vmatprep.subr.mxu0 0.0
    %701 = vmatpush1.msra.mxu0 0.0
    %702 = vmatprep.subr.mxu0 0.0
    %703 = vmatpush1.msra.mxu0 0.0
    %704 = vmatprep.subr.mxu0 0.0
    %705 = vmatpush1.msra.mxu0 0.0
    %706 = vmatprep.subr.mxu0 0.0
    %707 = vmatpush1.msra.mxu0 0.0
    %708 = vmatprep.subr.mxu0 0.0
    %709 = vmatpush1.msra.mxu0 0.0
    %710 = vmatprep.subr.mxu0 0.0
    %711 = vmatpush1.msra.mxu0 0.0
    %712 = vmatprep.subr.mxu0 0.0
    %713 = vmatpush1.msra.mxu0 0.0
    %714 = vmatprep.subr.mxu0 0.0
    %715 = vmatpush1.msra.mxu0 0.0
    %716 = vmatprep.subr.mxu0 0.0
    %717 = vmatpush1.msra.mxu0 0.0
    %718 = vmatprep.subr.mxu0 0.0
    %719 = vmatpush1.msra.mxu0 0.0
    %720 = vmatprep.subr.mxu0 0.0
    %721 = vmatpush1.msra.mxu0 0.0
    %722 = vmatprep.subr.mxu0 0.0
    %723 = vmatpush1.msra.mxu0 0.0
    %724 = vmatprep.subr.mxu0 0.0
    %725 = vmatpush1.msra.mxu0 0.0
    %726 = vmatprep.subr.mxu0 0.0
    %727 = vmatpush1.msra.mxu0 0.0
    %728 = vmatprep.mubr.f32.mxu0 0.0
    %729 = vmatmul.mubr.f32.gmra.mrb[0].mxu0 %v656
    %v730 = vpop.f32.mrb[0].mxu0
    %v731 = vadd.f32 %v663, %v730
    %v732 = vpop.f32.mrb[0].mxu0
    %733 = vmatprep.mubr.f32.mxu0 0.0
    %734 = vmatmul.mubr.f32.gmra.mrb[0].mxu0 %v657
    %v735 = vpop.f32.mrb[0].mxu0
    %v736 = vadd.f32 %v663, %v735
    %v737 = vpop.f32.mrb[0].mxu0
    %738 = vmatprep.mubr.f32.mxu0 0.0
    %739 = vmatmul.mubr.f32.gmra.mrb[0].mxu0 %v658
    %v740 = vpop.f32.mrb[0].mxu0
    %v741 = vadd.f32 %v663, %v740
    %v742 = vpop.f32.mrb[0].mxu0
    %743 = vmatprep.mubr.f32.mxu0 0.0
    %744 = vmatmul.mubr.f32.gmra.mrb[0].mxu0 %v659
    %v745 = vpop.f32.mrb[0].mxu0
    %v746 = vadd.f32 %v663, %v745
    %v747 = vpop.f32.mrb[0].mxu0
    %748 = vdwg.mxu0
    %v753 = vrot.slane %v731, 1
    %v754 = vrot.slane %v731, 2
    %v755 = vrot.slane %v731, 3
    %v756 = vrot.slane %v731, 4
    %v757 = vrot.slane %v731, 5
    %v758 = vrot.slane %v731, 6
    %v759 = vrot.slane %v731, 7
    %v760 = vrot.slane %v736, 1
    %v761 = vrot.slane %v736, 2
    %v762 = vrot.slane %v736, 3
    %v763 = vrot.slane %v736, 4
    %v764 = vrot.slane %v736, 5
    %v765 = vrot.slane %v736, 6
    %v766 = vrot.slane %v736, 7
    %v767 = vrot.slane %v741, 1
    %v768 = vrot.slane %v741, 2
    %v769 = vrot.slane %v741, 3
    %v770 = vrot.slane %v741, 4
    %v771 = vrot.slane %v741, 5
    %v772 = vrot.slane %v741, 6
    %v773 = vrot.slane %v741, 7
    %v774 = vrot.slane %v746, 1
    %v775 = vrot.slane %v746, 2
    %v776 = vrot.slane %v746, 3
    %v777 = vrot.slane %v746, 4
    %v778 = vrot.slane %v746, 5
    %v779 = vrot.slane %v746, 6
    %v780 = vrot.slane %v746, 7
    %v813 = vadd.f32 %v174, %v731
    %v814 = vadd.f32 %v175, %v753
    %v815 = vadd.f32 %v176, %v754
    %v816 = vadd.f32 %v177, %v755
    %v817 = vadd.f32 %v178, %v756
    %v818 = vadd.f32 %v179, %v757
    %v819 = vadd.f32 %v180, %v758
    %v820 = vadd.f32 %v181, %v759
    %v821 = vadd.f32 %v182, %v736
    %v822 = vadd.f32 %v183, %v760
    %v823 = vadd.f32 %v184, %v761
    %v824 = vadd.f32 %v185, %v762
    %v825 = vadd.f32 %v186, %v763
    %v826 = vadd.f32 %v187, %v764
    %v827 = vadd.f32 %v188, %v765
    %v828 = vadd.f32 %v189, %v766
    %v829 = vadd.f32 %v190, %v741
    %v830 = vadd.f32 %v191, %v767
    %v831 = vadd.f32 %v192, %v768
    %v832 = vadd.f32 %v193, %v769
    %v833 = vadd.f32 %v194, %v770
    %v834 = vadd.f32 %v195, %v771
    %v835 = vadd.f32 %v196, %v772
    %v836 = vadd.f32 %v197, %v773
    %v837 = vadd.f32 %v198, %v746
    %v838 = vadd.f32 %v199, %v774
    %v839 = vadd.f32 %v200, %v775
    %v840 = vadd.f32 %v201, %v776
    %v841 = vadd.f32 %v202, %v777
    %v842 = vadd.f32 %v203, %v778
    %v843 = vadd.f32 %v204, %v779
    %v844 = vadd.f32 %v205, %v780
    %v877 = vrot.slane %v600, 7
    %vm878 = vcmask 1041409
    %v879 = vsel %vm878, %v877, %v599
    %v880 = vrot.slane %v601, 6
    %vm881 = vcmask 1042434
    %v882 = vsel %vm881, %v880, %v879
    %v883 = vrot.slane %v602, 5
    %vm884 = vcmask 1043459
    %v885 = vsel %vm884, %v883, %v882
    %v886 = vrot.slane %v603, 4
    %vm887 = vcmask 1044484
    %v888 = vsel %vm887, %v886, %v885
    %v889 = vrot.slane %v604, 3
    %vm890 = vcmask 1045509
    %v891 = vsel %vm890, %v889, %v888
    %v892 = vrot.slane %v605, 2
    %vm893 = vcmask 1046534
    %v894 = vsel %vm893, %v892, %v891
    %v895 = vrot.slane %v606, 1
    %vm896 = vcmask 1047559
    %v897 = vsel %vm896, %v895, %v894
    %v898 = vrot.slane %v608, 7
    %v899 = vsel %vm878, %v898, %v607
    %v900 = vrot.slane %v609, 6
    %v901 = vsel %vm881, %v900, %v899
    %v902 = vrot.slane %v610, 5
    %v903 = vsel %vm884, %v902, %v901
    %v904 = vrot.slane %v611, 4
    %v905 = vsel %vm887, %v904, %v903
    %v906 = vrot.slane %v612, 3
    %v907 = vsel %vm890, %v906, %v905
    %v908 = vrot.slane %v613, 2
    %v909 = vsel %vm893, %v908, %v907
    %v910 = vrot.slane %v614, 1
    %v911 = vsel %vm896, %v910, %v909
    %v912 = vrot.slane %v616, 7
    %v913 = vsel %vm878, %v912, %v615
    %v914 = vrot.slane %v617, 6
    %v915 = vsel %vm881, %v914, %v913
    %v916 = vrot.slane %v618, 5
    %v917 = vsel %vm884, %v916, %v915
    %v918 = vrot.slane %v619, 4
    %v919 = vsel %vm887, %v918, %v917
    %v920 = vrot.slane %v620, 3
    %v921 = vsel %vm890, %v920, %v919
    %v922 = vrot.slane %v621, 2
    %v923 = vsel %vm893, %v922, %v921
    %v924 = vrot.slane %v622, 1
    %v925 = vsel %vm896, %v924, %v923
    %v926 = vrot.slane %v624, 7
    %v927 = vsel %vm878, %v926, %v623
    %v928 = vrot.slane %v625, 6
    %v929 = vsel %vm881, %v928, %v927
    %v930 = vrot.slane %v626, 5
    %v931 = vsel %vm884, %v930, %v929
    %v932 = vrot.slane %v627, 4
    %v933 = vsel %vm887, %v932, %v931
    %v934 = vrot.slane %v628, 3
    %v935 = vsel %vm890, %v934, %v933
    %v936 = vrot.slane %v629, 2
    %v937 = vsel %vm893, %v936, %v935
    %v938 = vrot.slane %v630, 1
    %v939 = vsel %vm896, %v938, %v937
    %vm940 = vcmask 261120
    %v941 = vsel %vm940, %v897, 0
    %v943 = vsel %vm940, %v911, 0
    %v945 = vsel %vm940, %v925, 0
    %v947 = vsel %vm940, %v939, 0
    %949 = vmatprep.subr.mxu0 0.0
    %950 = vmatpush1.msra.mxu0 %v651
    %951 = vmatprep.subr.mxu0 0.0
    %952 = vmatpush1.msra.mxu0 %v652
    %953 = vmatprep.subr.mxu0 0.0
    %954 = vmatpush1.msra.mxu0 %v653
    %955 = vmatprep.subr.mxu0 0.0
    %956 = vmatpush1.msra.mxu0 %v654
    %957 = vmatprep.subr.mxu0 0.0
    %958 = vmatpush1.msra.mxu0 0.0
    %959 = vmatprep.subr.mxu0 0.0
    %960 = vmatpush1.msra.mxu0 0.0
    %961 = vmatprep.subr.mxu0 0.0
    %962 = vmatpush1.msra.mxu0 0.0
    %963 = vmatprep.subr.mxu0 0.0
    %964 = vmatpush1.msra.mxu0 0.0
    %965 = vmatprep.subr.mxu0 0.0
    %966 = vmatpush1.msra.mxu0 0.0
    %967 = vmatprep.subr.mxu0 0.0
    %968 = vmatpush1.msra.mxu0 0.0
    %969 = vmatprep.subr.mxu0 0.0
    %970 = vmatpush1.msra.mxu0 0.0
    %971 = vmatprep.subr.mxu0 0.0
    %972 = vmatpush1.msra.mxu0 0.0
    %973 = vmatprep.subr.mxu0 0.0
    %974 = vmatpush1.msra.mxu0 0.0
    %975 = vmatprep.subr.mxu0 0.0
    %976 = vmatpush1.msra.mxu0 0.0
    %977 = vmatprep.subr.mxu0 0.0
    %978 = vmatpush1.msra.mxu0 0.0
    %979 = vmatprep.subr.mxu0 0.0
    %980 = vmatpush1.msra.mxu0 0.0
    %981 = vmatprep.subr.mxu0 0.0
    %982 = vmatpush1.msra.mxu0 0.0
    %983 = vmatprep.subr.mxu0 0.0
    %984 = vmatpush1.msra.mxu0 0.0
    %985 = vmatprep.subr.mxu0 0.0
    %986 = vmatpush1.msra.mxu0 0.0
    %987 = vmatprep.subr.mxu0 0.0
    %988 = vmatpush1.msra.mxu0 0.0
    %989 = vmatprep.subr.mxu0 0.0
    %990 = vmatpush1.msra.mxu0 0.0
    %991 = vmatprep.subr.mxu0 0.0
    %992 = vmatpush1.msra.mxu0 0.0
    %993 = vmatprep.subr.mxu0 0.0
    %994 = vmatpush1.msra.mxu0 0.0
    %995 = vmatprep.subr.mxu0 0.0
    %996 = vmatpush1.msra.mxu0 0.0
    %997 = vmatprep.subr.mxu0 0.0
    %998 = vmatpush1.msra.mxu0 0.0
    %999 = vmatprep.subr.mxu0 0.0
    %1000 = vmatpush1.msra.mxu0 0.0
    %1001 = vmatprep.subr.mxu0 0.0
    %1002 = vmatpush1.msra.mxu0 0.0
    %1003 = vmatprep.subr.mxu0 0.0
    %1004 = vmatpush1.msra.mxu0 0.0
    %1005 = vmatprep.subr.mxu0 0.0
    %1006 = vmatpush1.msra.mxu0 0.0
    %1007 = vmatprep.subr.mxu0 0.0
    %1008 = vmatpush1.msra.mxu0 0.0
    %1009 = vmatprep.subr.mxu0 0.0
    %1010 = vmatpush1.msra.mxu0 0.0
    %1011 = vmatprep.subr.mxu0 0.0
    %1012 = vmatpush1.msra.mxu0 0.0
    %1013 = vmatprep.mubr.f32.mxu0 0.0
    %1014 = vmatmul.mubr.f32.gmra.mrb[0].mxu0 %v941
    %v1015 = vpop.f32.mrb[0].mxu0
    %v1016 = vadd.f32 0.0, %v1015
    %v1017 = vpop.f32.mrb[0].mxu0
    %1018 = vmatprep.mubr.f32.mxu0 0.0
    %1019 = vmatmul.mubr.f32.gmra.mrb[0].mxu0 %v943
    %v1020 = vpop.f32.mrb[0].mxu0
    %v1021 = vadd.f32 0.0, %v1020
    %v1022 = vpop.f32.mrb[0].mxu0
    %1023 = vmatprep.mubr.f32.mxu0 0.0
    %1024 = vmatmul.mubr.f32.gmra.mrb[0].mxu0 %v945
    %v1025 = vpop.f32.mrb[0].mxu0
    %v1026 = vadd.f32 0.0, %v1025
    %v1027 = vpop.f32.mrb[0].mxu0
    %1028 = vmatprep.mubr.f32.mxu0 0.0
    %1029 = vmatmul.mubr.f32.gmra.mrb[0].mxu0 %v947
    %v1030 = vpop.f32.mrb[0].mxu0
    %v1031 = vadd.f32 0.0, %v1030
    %v1032 = vpop.f32.mrb[0].mxu0
    %1033 = vdwg.mxu0
    %v1066 = vrot.slane %v814, 7
    %v1067 = vsel %vm878, %v1066, %v813
    %v1068 = vrot.slane %v815, 6
    %v1069 = vsel %vm881, %v1068, %v1067
    %v1070 = vrot.slane %v816, 5
    %v1071 = vsel %vm884, %v1070, %v1069
    %v1072 = vrot.slane %v817, 4
    %v1073 = vsel %vm887, %v1072, %v1071
    %v1074 = vrot.slane %v818, 3
    %v1075 = vsel %vm890, %v1074, %v1073
    %v1076 = vrot.slane %v819, 2
    %v1077 = vsel %vm893, %v1076, %v1075
    %v1078 = vrot.slane %v820, 1
    %v1079 = vsel %vm896, %v1078, %v1077
    %v1080 = vrot.slane %v822, 7
    %v1081 = vsel %vm878, %v1080, %v821
    %v1082 = vrot.slane %v823, 6
    %v1083 = vsel %vm881, %v1082, %v1081
    %v1084 = vrot.slane %v824, 5
    %v1085 = vsel %vm884, %v1084, %v1083
    %v1086 = vrot.slane %v825, 4
    %v1087 = vsel %vm887, %v1086, %v1085
    %v1088 = vrot.slane %v826, 3
    %v1089 = vsel %vm890, %v1088, %v1087
    %v1090 = vrot.slane %v827, 2
    %v1091 = vsel %vm893, %v1090, %v1089
    %v1092 = vrot.slane %v828, 1
    %v1093 = vsel %vm896, %v1092, %v1091
    %v1094 = vrot.slane %v830, 7
    %v1095 = vsel %vm878, %v1094, %v829
    %v1096 = vrot.slane %v831, 6
    %v1097 = vsel %vm881, %v1096, %v1095
    %v1098 = vrot.slane %v832, 5
    %v1099 = vsel %vm884, %v1098, %v1097
    %v1100 = vrot.slane %v833, 4
    %v1101 = vsel %vm887, %v1100, %v1099
    %v1102 = vrot.slane %v834, 3
    %v1103 = vsel %vm890, %v1102, %v1101
    %v1104 = vrot.slane %v835, 2
    %v1105 = vsel %vm893, %v1104, %v1103
    %v1106 = vrot.slane %v836, 1
    %v1107 = vsel %vm896, %v1106, %v1105
    %v1108 = vrot.slane %v838, 7
    %v1109 = vsel %vm878, %v1108, %v837
    %v1110 = vrot.slane %v839, 6
    %v1111 = vsel %vm881, %v1110, %v1109
    %v1112 = vrot.slane %v840, 5
    %v1113 = vsel %vm884, %v1112, %v1111
    %v1114 = vrot.slane %v841, 4
    %v1115 = vsel %vm887, %v1114, %v1113
    %v1116 = vrot.slane %v842, 3
    %v1117 = vsel %vm890, %v1116, %v1115
    %v1118 = vrot.slane %v843, 2
    %v1119 = vsel %vm893, %v1118, %v1117
    %v1120 = vrot.slane %v844, 1
    %v1121 = vsel %vm896, %v1120, %v1119
    %v1122 = vsel %vm940, %v1079, 0
    %v1124 = vsel %vm940, %v1093, 0
    %v1126 = vsel %vm940, %v1107, 0
    %v1128 = vsel %vm940, %v1121, 0
    %1130 = vmatprep.subr.mxu0 0.0
    %1131 = vmatpush1.msra.mxu0 %v647
    %1132 = vmatprep.subr.mxu0 0.0
    %1133 = vmatpush1.msra.mxu0 %v648
    %1134 = vmatprep.subr.mxu0 0.0
    %1135 = vmatpush1.msra.mxu0 %v649
    %1136 = vmatprep.subr.mxu0 0.0
    %1137 = vmatpush1.msra.mxu0 %v650
    %1138 = vmatprep.subr.mxu0 0.0
    %1139 = vmatpush1.msra.mxu0 0.0
    %1140 = vmatprep.subr.mxu0 0.0
    %1141 = vmatpush1.msra.mxu0 0.0
    %1142 = vmatprep.subr.mxu0 0.0
    %1143 = vmatpush1.msra.mxu0 0.0
    %1144 = vmatprep.subr.mxu0 0.0
    %1145 = vmatpush1.msra.mxu0 0.0
    %1146 = vmatprep.subr.mxu0 0.0
    %1147 = vmatpush1.msra.mxu0 0.0
    %1148 = vmatprep.subr.mxu0 0.0
    %1149 = vmatpush1.msra.mxu0 0.0
    %1150 = vmatprep.subr.mxu0 0.0
    %1151 = vmatpush1.msra.mxu0 0.0
    %1152 = vmatprep.subr.mxu0 0.0
    %1153 = vmatpush1.msra.mxu0 0.0
    %1154 = vmatprep.subr.mxu0 0.0
    %1155 = vmatpush1.msra.mxu0 0.0
    %1156 = vmatprep.subr.mxu0 0.0
    %1157 = vmatpush1.msra.mxu0 0.0
    %1158 = vmatprep.subr.mxu0 0.0
    %1159 = vmatpush1.msra.mxu0 0.0
    %1160 = vmatprep.subr.mxu0 0.0
    %1161 = vmatpush1.msra.mxu0 0.0
    %1162 = vmatprep.subr.mxu0 0.0
    %1163 = vmatpush1.msra.mxu0 0.0
    %1164 = vmatprep.subr.mxu0 0.0
    %1165 = vmatpush1.msra.mxu0 0.0
    %1166 = vmatprep.subr.mxu0 0.0
    %1167 = vmatpush1.msra.mxu0 0.0
    %1168 = vmatprep.subr.mxu0 0.0
    %1169 = vmatpush1.msra.mxu0 0.0
    %1170 = vmatprep.subr.mxu0 0.0
    %1171 = vmatpush1.msra.mxu0 0.0
    %1172 = vmatprep.subr.mxu0 0.0
    %1173 = vmatpush1.msra.mxu0 0.0
    %1174 = vmatprep.subr.mxu0 0.0
    %1175 = vmatpush1.msra.mxu0 0.0
    %1176 = vmatprep.subr.mxu0 0.0
    %1177 = vmatpush1.msra.mxu0 0.0
    %1178 = vmatprep.subr.mxu0 0.0
    %1179 = vmatpush1.msra.mxu0 0.0
    %1180 = vmatprep.subr.mxu0 0.0
    %1181 = vmatpush1.msra.mxu0 0.0
    %1182 = vmatprep.subr.mxu0 0.0
    %1183 = vmatpush1.msra.mxu0 0.0
    %1184 = vmatprep.subr.mxu0 0.0
    %1185 = vmatpush1.msra.mxu0 0.0
    %1186 = vmatprep.subr.mxu0 0.0
    %1187 = vmatpush1.msra.mxu0 0.0
    %1188 = vmatprep.subr.mxu0 0.0
    %1189 = vmatpush1.msra.mxu0 0.0
    %1190 = vmatprep.subr.mxu0 0.0
    %1191 = vmatpush1.msra.mxu0 0.0
    %1192 = vmatprep.subr.mxu0 0.0
    %1193 = vmatpush1.msra.mxu0 0.0
    %1194 = vmatprep.mubr.f32.mxu0 0.0
    %1195 = vmatmul.mubr.f32.gmra.mrb[0].mxu0 %v1122
    %v1196 = vpop.f32.mrb[0].mxu0
    %v1197 = vadd.f32 %v1016, %v1196
    %v1198 = vpop.f32.mrb[0].mxu0
    %1199 = vmatprep.mubr.f32.mxu0 0.0
    %1200 = vmatmul.mubr.f32.gmra.mrb[0].mxu0 %v1124
    %v1201 = vpop.f32.mrb[0].mxu0
    %v1202 = vadd.f32 %v1021, %v1201
    %v1203 = vpop.f32.mrb[0].mxu0
    %1204 = vmatprep.mubr.f32.mxu0 0.0
    %1205 = vmatmul.mubr.f32.gmra.mrb[0].mxu0 %v1126
    %v1206 = vpop.f32.mrb[0].mxu0
    %v1207 = vadd.f32 %v1026, %v1206
    %v1208 = vpop.f32.mrb[0].mxu0
    %1209 = vmatprep.mubr.f32.mxu0 0.0
    %1210 = vmatmul.mubr.f32.gmra.mrb[0].mxu0 %v1128
    %v1211 = vpop.f32.mrb[0].mxu0
    %v1212 = vadd.f32 %v1031, %v1211
    %v1213 = vpop.f32.mrb[0].mxu0
    %1214 = vdwg.mxu0
    %v1215 = vlaneseq
    %v1216 = vshrl.u32 %v1215, 7
    %v1217 = vsub.s32 1, %v1216
    %v1218 = vrot.slane %v655, %v1217
    %v1219 = vadd.f32 %v1197, %v1218
    %v1220 = vadd.f32 %v1202, %v1218
    %v1221 = vadd.f32 %v1207, %v1218
    %v1222 = vadd.f32 %v1212, %v1218
    %v1223 = vld [vmem:[%s3] sm:$0xff]
    %v1224 = vld [vmem:[%s3 + $0x8] sm:$0xff]
    %v1225 = vld [vmem:[%s3 + $0x10] sm:$0xff]
    %v1226 = vld [vmem:[%s3 + $0x18] sm:$0xff]
    %v1227 = vadd.f32 %v1219, %v1223
    %v1228 = vadd.f32 %v1220, %v1224
    %v1229 = vadd.f32 %v1221, %v1225
    %v1230 = vadd.f32 %v1222, %v1226
    %1233 = vrot.lane.b32.xlu0 %v1229, 32
    %v1234 = vpop.permute.xlu0 %1233
    %1235 = vrot.lane.b32.xlu0 %v1230, 32
    %v1236 = vpop.permute.xlu0 %1235
    %v1239 = vsel %vm940, %v1227, %v1234
    %v1240 = vsel %vm940, %v1228, %v1236
    %v1241 = vld [vmem:[%s6] sm:$0xff]
    %v1242 = vld [vmem:[%s6 + $0x8] sm:$0xff]
    %v1243 = vld [vmem:[%s6 + $0x10] sm:$0xff]
    %v1244 = vld [vmem:[%s6 + $0x18] sm:$0xff]
    %v1245 = vld [vmem:[%s6 + $0x20] sm:$0xff]
    %v1246 = vld [vmem:[%s6 + $0x28] sm:$0xff]
    %v1247 = vld [vmem:[%s6 + $0x30] sm:$0xff]
    %v1248 = vld [vmem:[%s6 + $0x38] sm:$0xff]
    %v1249 = vld [vmem:[%s6 + $0x40] sm:$0xff]
    %v1250 = vld [vmem:[%s6 + $0x48] sm:$0xff]
    %v1251 = vld [vmem:[%s6 + $0x50] sm:$0xff]
    %v1252 = vld [vmem:[%s6 + $0x58] sm:$0xff]
    %v1253 = vld [vmem:[%s6 + $0x60] sm:$0xff]
    %v1254 = vld [vmem:[%s6 + $0x68] sm:$0xff]
    %v1255 = vld [vmem:[%s6 + $0x70] sm:$0xff]
    %v1256 = vld [vmem:[%s6 + $0x78] sm:$0xff]
    %v1257 = vld [vmem:[%s6 + $0x80] sm:$0xff]
    %v1258 = vld [vmem:[%s6 + $0x88] sm:$0xff]
    %v1259 = vld [vmem:[%s6 + $0x90] sm:$0xff]
    %v1260 = vld [vmem:[%s6 + $0x98] sm:$0xff]
    %v1261 = vld [vmem:[%s6 + $0xa0] sm:$0xff]
    %v1262 = vld [vmem:[%s6 + $0xa8] sm:$0xff]
    %v1263 = vld [vmem:[%s6 + $0xb0] sm:$0xff]
    %v1264 = vld [vmem:[%s6 + $0xb8] sm:$0xff]
    %v1265 = vld [vmem:[%s6 + $0xc0] sm:$0xff]
    %v1266 = vld [vmem:[%s6 + $0xc8] sm:$0xff]
    %v1267 = vld [vmem:[%s6 + $0xd0] sm:$0xff]
    %v1268 = vld [vmem:[%s6 + $0xd8] sm:$0xff]
    %v1269 = vld [vmem:[%s6 + $0xe0] sm:$0xff]
    %v1270 = vld [vmem:[%s6 + $0xe8] sm:$0xff]
    %v1271 = vld [vmem:[%s6 + $0xf0] sm:$0xff]
    %v1272 = vld [vmem:[%s6 + $0xf8] sm:$0xff]
    %v1273 = vld [vmem:[%s6 + $0x100] sm:$0xff]
    %v1274 = vld [vmem:[%s6 + $0x108] sm:$0xff]
    %v1275 = vld [vmem:[%s6 + $0x110] sm:$0xff]
    %v1276 = vld [vmem:[%s6 + $0x118] sm:$0xff]
    %v1277 = vld [vmem:[%s6 + $0x120] sm:$0xff]
    %v1278 = vld [vmem:[%s6 + $0x128] sm:$0xff]
    %v1279 = vld [vmem:[%s6 + $0x130] sm:$0xff]
    %v1280 = vld [vmem:[%s6 + $0x138] sm:$0xff]
    %v1281 = vld [vmem:[%s7] sm:$0x1f]
    %v1282 = vlaneseq
    %v1283 = vshrl.u32 %v1282, 7
    %v1284 = vsub.s32 0, %v1283
    %v1285 = vrot.slane %v1281, %v1284
    %vm1286 = vcmask 523264
    %v1288 = vsel %vm1286, %v1239, 0
    %v1291 = vsel %vm1286, %v1240, 0
    %1293 = vmatprep.subr.mxu0 0.0
    %1294 = vmatpush1.msra.mxu0 %v1241
    %1295 = vmatprep.subr.mxu0 0.0
    %1296 = vmatpush1.msra.mxu0 %v1242
    %1297 = vmatprep.subr.mxu0 0.0
    %1298 = vmatpush1.msra.mxu0 %v1243
    %1299 = vmatprep.subr.mxu0 0.0
    %1300 = vmatpush1.msra.mxu0 %v1244
    %1301 = vmatprep.subr.mxu0 0.0
    %1302 = vmatpush1.msra.mxu0 %v1245
    %1303 = vmatprep.subr.mxu0 0.0
    %1304 = vmatpush1.msra.mxu0 %v1246
    %1305 = vmatprep.subr.mxu0 0.0
    %1306 = vmatpush1.msra.mxu0 %v1247
    %1307 = vmatprep.subr.mxu0 0.0
    %1308 = vmatpush1.msra.mxu0 %v1248
    %1309 = vmatprep.subr.mxu0 0.0
    %1310 = vmatpush1.msra.mxu0 0.0
    %1311 = vmatprep.subr.mxu0 0.0
    %1312 = vmatpush1.msra.mxu0 0.0
    %1313 = vmatprep.subr.mxu0 0.0
    %1314 = vmatpush1.msra.mxu0 0.0
    %1315 = vmatprep.subr.mxu0 0.0
    %1316 = vmatpush1.msra.mxu0 0.0
    %1317 = vmatprep.subr.mxu0 0.0
    %1318 = vmatpush1.msra.mxu0 0.0
    %1319 = vmatprep.subr.mxu0 0.0
    %1320 = vmatpush1.msra.mxu0 0.0
    %1321 = vmatprep.subr.mxu0 0.0
    %1322 = vmatpush1.msra.mxu0 0.0
    %1323 = vmatprep.subr.mxu0 0.0
    %1324 = vmatpush1.msra.mxu0 0.0
    %1325 = vmatprep.subr.mxu0 0.0
    %1326 = vmatpush1.msra.mxu0 0.0
    %1327 = vmatprep.subr.mxu0 0.0
    %1328 = vmatpush1.msra.mxu0 0.0
    %1329 = vmatprep.subr.mxu0 0.0
    %1330 = vmatpush1.msra.mxu0 0.0
    %1331 = vmatprep.subr.mxu0 0.0
    %1332 = vmatpush1.msra.mxu0 0.0
    %1333 = vmatprep.subr.mxu0 0.0
    %1334 = vmatpush1.msra.mxu0 0.0
    %1335 = vmatprep.subr.mxu0 0.0
    %1336 = vmatpush1.msra.mxu0 0.0
    %1337 = vmatprep.subr.mxu0 0.0
    %1338 = vmatpush1.msra.mxu0 0.0
    %1339 = vmatprep.subr.mxu0 0.0
    %1340 = vmatpush1.msra.mxu0 0.0
    %1341 = vmatprep.subr.mxu0 0.0
    %1342 = vmatpush1.msra.mxu0 0.0
    %1343 = vmatprep.subr.mxu0 0.0
    %1344 = vmatpush1.msra.mxu0 0.0
    %1345 = vmatprep.subr.mxu0 0.0
    %1346 = vmatpush1.msra.mxu0 0.0
    %1347 = vmatprep.subr.mxu0 0.0
    %1348 = vmatpush1.msra.mxu0 0.0
    %1349 = vmatprep.subr.mxu0 0.0
    %1350 = vmatpush1.msra.mxu0 0.0
    %1351 = vmatprep.subr.mxu0 0.0
    %1352 = vmatpush1.msra.mxu0 0.0
    %1353 = vmatprep.subr.mxu0 0.0
    %1354 = vmatpush1.msra.mxu0 0.0
    %1355 = vmatprep.subr.mxu0 0.0
    %1356 = vmatpush1.msra.mxu0 0.0
    %1357 = vmatprep.mubr.f32.mxu0 0.0
    %1358 = vmatmul.mubr.f32.gmra.mrb[0].mxu0 %v1288
    %v1359 = vpop.f32.mrb[0].mxu0
    %v1360 = vadd.f32 %v1285, %v1359
    %v1361 = vpop.f32.mrb[0].mxu0
    %1362 = vmatprep.mubr.f32.mxu0 0.0
    %1363 = vmatmul.mubr.f32.gmra.mrb[0].mxu0 %v1291
    %v1364 = vpop.f32.mrb[0].mxu0
    %v1365 = vadd.f32 %v1285, %v1364
    %v1366 = vpop.f32.mrb[0].mxu0
    %1367 = vdwg.mxu0
    %v1368 = vmax.f32 %v1360, 0.0
    %v1369 = vmax.f32 %v1365, 0.0
    %v1371 = vsel %vm1286, %v1368, 0
    %v1374 = vsel %vm1286, %v1369, 0
    %1376 = vmatprep.subr.mxu0 0.0
    %1377 = vmatpush1.msra.mxu0 %v1249
    %1378 = vmatprep.subr.mxu0 0.0
    %1379 = vmatpush1.msra.mxu0 %v1250
    %1380 = vmatprep.subr.mxu0 0.0
    %1381 = vmatpush1.msra.mxu0 %v1251
    %1382 = vmatprep.subr.mxu0 0.0
    %1383 = vmatpush1.msra.mxu0 %v1252
    %1384 = vmatprep.subr.mxu0 0.0
    %1385 = vmatpush1.msra.mxu0 %v1253
    %1386 = vmatprep.subr.mxu0 0.0
    %1387 = vmatpush1.msra.mxu0 %v1254
    %1388 = vmatprep.subr.mxu0 0.0
    %1389 = vmatpush1.msra.mxu0 %v1255
    %1390 = vmatprep.subr.mxu0 0.0
    %1391 = vmatpush1.msra.mxu0 %v1256
    %1392 = vmatprep.subr.mxu0 0.0
    %1393 = vmatpush1.msra.mxu0 0.0
    %1394 = vmatprep.subr.mxu0 0.0
    %1395 = vmatpush1.msra.mxu0 0.0
    %1396 = vmatprep.subr.mxu0 0.0
    %1397 = vmatpush1.msra.mxu0 0.0
    %1398 = vmatprep.subr.mxu0 0.0
    %1399 = vmatpush1.msra.mxu0 0.0
    %1400 = vmatprep.subr.mxu0 0.0
    %1401 = vmatpush1.msra.mxu0 0.0
    %1402 = vmatprep.subr.mxu0 0.0
    %1403 = vmatpush1.msra.mxu0 0.0
    %1404 = vmatprep.subr.mxu0 0.0
    %1405 = vmatpush1.msra.mxu0 0.0
    %1406 = vmatprep.subr.mxu0 0.0
    %1407 = vmatpush1.msra.mxu0 0.0
    %1408 = vmatprep.subr.mxu0 0.0
    %1409 = vmatpush1.msra.mxu0 0.0
    %1410 = vmatprep.subr.mxu0 0.0
    %1411 = vmatpush1.msra.mxu0 0.0
    %1412 = vmatprep.subr.mxu0 0.0
    %1413 = vmatpush1.msra.mxu0 0.0
    %1414 = vmatprep.subr.mxu0 0.0
    %1415 = vmatpush1.msra.mxu0 0.0
    %1416 = vmatprep.subr.mxu0 0.0
    %1417 = vmatpush1.msra.mxu0 0.0
    %1418 = vmatprep.subr.mxu0 0.0
    %1419 = vmatpush1.msra.mxu0 0.0
    %1420 = vmatprep.subr.mxu0 0.0
    %1421 = vmatpush1.msra.mxu0 0.0
    %1422 = vmatprep.subr.mxu0 0.0
    %1423 = vmatpush1.msra.mxu0 0.0
    %1424 = vmatprep.subr.mxu0 0.0
    %1425 = vmatpush1.msra.mxu0 0.0
    %1426 = vmatprep.subr.mxu0 0.0
    %1427 = vmatpush1.msra.mxu0 0.0
    %1428 = vmatprep.subr.mxu0 0.0
    %1429 = vmatpush1.msra.mxu0 0.0
    %1430 = vmatprep.subr.mxu0 0.0
    %1431 = vmatpush1.msra.mxu0 0.0
    %1432 = vmatprep.subr.mxu0 0.0
    %1433 = vmatpush1.msra.mxu0 0.0
    %1434 = vmatprep.subr.mxu0 0.0
    %1435 = vmatpush1.msra.mxu0 0.0
    %1436 = vmatprep.subr.mxu0 0.0
    %1437 = vmatpush1.msra.mxu0 0.0
    %1438 = vmatprep.subr.mxu0 0.0
    %1439 = vmatpush1.msra.mxu0 0.0
    %1440 = vmatprep.mubr.f32.mxu0 0.0
    %1441 = vmatmul.mubr.f32.gmra.mrb[0].mxu0 %v1371
    %v1442 = vpop.f32.mrb[0].mxu0
    %v1443 = vadd.f32 0.0, %v1442
    %v1444 = vpop.f32.mrb[0].mxu0
    %1445 = vmatprep.mubr.f32.mxu0 0.0
    %1446 = vmatmul.mubr.f32.gmra.mrb[0].mxu0 %v1374
    %v1447 = vpop.f32.mrb[0].mxu0
    %v1448 = vadd.f32 0.0, %v1447
    %v1449 = vpop.f32.mrb[0].mxu0
    %1450 = vdwg.mxu0
    %v1451 = vadd.f32 %v1239, %v1443
    %v1452 = vadd.f32 %v1240, %v1448
    %v1453 = vlaneseq
    %v1454 = vshrl.u32 %v1453, 7
    %v1455 = vsub.s32 1, %v1454
    %v1456 = vrot.slane %v1281, %v1455
    %v1457 = vadd.f32 %v1451, %v1456
    %v1458 = vadd.f32 %v1452, %v1456
    %v1459 = vmax.f32 %v1457, 0.0
    %v1460 = vmax.f32 %v1458, 0.0
    %v1461 = vlaneseq
    %v1462 = vshrl.u32 %v1461, 7
    %v1463 = vsub.s32 2, %v1462
    %v1464 = vrot.slane %v1281, %v1463
    %v1466 = vsel %vm1286, %v1459, 0
    %v1469 = vsel %vm1286, %v1460, 0
    %1471 = vmatprep.subr.mxu0 0.0
    %1472 = vmatpush1.msra.mxu0 %v1257
    %1473 = vmatprep.subr.mxu0 0.0
    %1474 = vmatpush1.msra.mxu0 %v1258
    %1475 = vmatprep.subr.mxu0 0.0
    %1476 = vmatpush1.msra.mxu0 %v1259
    %1477 = vmatprep.subr.mxu0 0.0
    %1478 = vmatpush1.msra.mxu0 %v1260
    %1479 = vmatprep.subr.mxu0 0.0
    %1480 = vmatpush1.msra.mxu0 %v1261
    %1481 = vmatprep.subr.mxu0 0.0
    %1482 = vmatpush1.msra.mxu0 %v1262
    %1483 = vmatprep.subr.mxu0 0.0
    %1484 = vmatpush1.msra.mxu0 %v1263
    %1485 = vmatprep.subr.mxu0 0.0
    %1486 = vmatpush1.msra.mxu0 %v1264
    %1487 = vmatprep.subr.mxu0 0.0
    %1488 = vmatpush1.msra.mxu0 0.0
    %1489 = vmatprep.subr.mxu0 0.0
    %1490 = vmatpush1.msra.mxu0 0.0
    %1491 = vmatprep.subr.mxu0 0.0
    %1492 = vmatpush1.msra.mxu0 0.0
    %1493 = vmatprep.subr.mxu0 0.0
    %1494 = vmatpush1.msra.mxu0 0.0
    %1495 = vmatprep.subr.mxu0 0.0
    %1496 = vmatpush1.msra.mxu0 0.0
    %1497 = vmatprep.subr.mxu0 0.0
    %1498 = vmatpush1.msra.mxu0 0.0
    %1499 = vmatprep.subr.mxu0 0.0
    %1500 = vmatpush1.msra.mxu0 0.0
    %1501 = vmatprep.subr.mxu0 0.0
    %1502 = vmatpush1.msra.mxu0 0.0
    %1503 = vmatprep.subr.mxu0 0.0
    %1504 = vmatpush1.msra.mxu0 0.0
    %1505 = vmatprep.subr.mxu0 0.0
    %1506 = vmatpush1.msra.mxu0 0.0
    %1507 = vmatprep.subr.mxu0 0.0
    %1508 = vmatpush1.msra.mxu0 0.0
    %1509 = vmatprep.subr.mxu0 0.0
    %1510 = vmatpush1.msra.mxu0 0.0
    %1511 = vmatprep.subr.mxu0 0.0
    %1512 = vmatpush1.msra.mxu0 0.0
    %1513 = vmatprep.subr.mxu0 0.0
    %1514 = vmatpush1.msra.mxu0 0.0
    %1515 = vmatprep.subr.mxu0 0.0
    %1516 = vmatpush1.msra.mxu0 0.0
    %1517 = vmatprep.subr.mxu0 0.0
    %1518 = vmatpush1.msra.mxu0 0.0
    %1519 = vmatprep.subr.mxu0 0.0
    %1520 = vmatpush1.msra.mxu0 0.0
    %1521 = vmatprep.subr.mxu0 0.0
    %1522 = vmatpush1.msra.mxu0 0.0
    %1523 = vmatprep.subr.mxu0 0.0
    %1524 = vmatpush1.msra.mxu0 0.0
    %1525 = vmatprep.subr.mxu0 0.0
    %1526 = vmatpush1.msra.mxu0 0.0
    %1527 = vmatprep.subr.mxu0 0.0
    %1528 = vmatpush1.msra.mxu0 0.0
    %1529 = vmatprep.subr.mxu0 0.0
    %1530 = vmatpush1.msra.mxu0 0.0
    %1531 = vmatprep.subr.mxu0 0.0
    %1532 = vmatpush1.msra.mxu0 0.0
    %1533 = vmatprep.subr.mxu0 0.0
    %1534 = vmatpush1.msra.mxu0 0.0
    %1535 = vmatprep.mubr.f32.mxu0 0.0
    %1536 = vmatmul.mubr.f32.gmra.mrb[0].mxu0 %v1466
    %v1537 = vpop.f32.mrb[0].mxu0
    %v1538 = vadd.f32 %v1464, %v1537
    %v1539 = vpop.f32.mrb[0].mxu0
    %1540 = vmatprep.mubr.f32.mxu0 0.0
    %1541 = vmatmul.mubr.f32.gmra.mrb[0].mxu0 %v1469
    %v1542 = vpop.f32.mrb[0].mxu0
    %v1543 = vadd.f32 %v1464, %v1542
    %v1544 = vpop.f32.mrb[0].mxu0
    %1545 = vdwg.mxu0
    %v1546 = vmax.f32 %v1538, 0.0
    %v1547 = vmax.f32 %v1543, 0.0
    %v1549 = vsel %vm1286, %v1546, 0
    %v1552 = vsel %vm1286, %v1547, 0
    %1554 = vmatprep.subr.mxu0 0.0
    %1555 = vmatpush1.msra.mxu0 %v1265
    %1556 = vmatprep.subr.mxu0 0.0
    %1557 = vmatpush1.msra.mxu0 %v1266
    %1558 = vmatprep.subr.mxu0 0.0
    %1559 = vmatpush1.msra.mxu0 %v1267
    %1560 = vmatprep.subr.mxu0 0.0
    %1561 = vmatpush1.msra.mxu0 %v1268
    %1562 = vmatprep.subr.mxu0 0.0
    %1563 = vmatpush1.msra.mxu0 %v1269
    %1564 = vmatprep.subr.mxu0 0.0
    %1565 = vmatpush1.msra.mxu0 %v1270
    %1566 = vmatprep.subr.mxu0 0.0
    %1567 = vmatpush1.msra.mxu0 %v1271
    %1568 = vmatprep.subr.mxu0 0.0
    %1569 = vmatpush1.msra.mxu0 %v1272
    %1570 = vmatprep.subr.mxu0 0.0
    %1571 = vmatpush1.msra.mxu0 0.0
    %1572 = vmatprep.subr.mxu0 0.0
    %1573 = vmatpush1.msra.mxu0 0.0
    %1574 = vmatprep.subr.mxu0 0.0
    %1575 = vmatpush1.msra.mxu0 0.0
    %1576 = vmatprep.subr.mxu0 0.0
    %1577 = vmatpush1.msra.mxu0 0.0
    %1578 = vmatprep.subr.mxu0 0.0
    %1579 = vmatpush1.msra.mxu0 0.0
    %1580 = vmatprep.subr.mxu0 0.0
    %1581 = vmatpush1.msra.mxu0 0.0
    %1582 = vmatprep.subr.mxu0 0.0
    %1583 = vmatpush1.msra.mxu0 0.0
    %1584 = vmatprep.subr.mxu0 0.0
    %1585 = vmatpush1.msra.mxu0 0.0
    %1586 = vmatprep.subr.mxu0 0.0
    %1587 = vmatpush1.msra.mxu0 0.0
    %1588 = vmatprep.subr.mxu0 0.0
    %1589 = vmatpush1.msra.mxu0 0.0
    %1590 = vmatprep.subr.mxu0 0.0
    %1591 = vmatpush1.msra.mxu0 0.0
    %1592 = vmatprep.subr.mxu0 0.0
    %1593 = vmatpush1.msra.mxu0 0.0
    %1594 = vmatprep.subr.mxu0 0.0
    %1595 = vmatpush1.msra.mxu0 0.0
    %1596 = vmatprep.subr.mxu0 0.0
    %1597 = vmatpush1.msra.mxu0 0.0
    %1598 = vmatprep.subr.mxu0 0.0
    %1599 = vmatpush1.msra.mxu0 0.0
    %1600 = vmatprep.subr.mxu0 0.0
    %1601 = vmatpush1.msra.mxu0 0.0
    %1602 = vmatprep.subr.mxu0 0.0
    %1603 = vmatpush1.msra.mxu0 0.0
    %1604 = vmatprep.subr.mxu0 0.0
    %1605 = vmatpush1.msra.mxu0 0.0
    %1606 = vmatprep.subr.mxu0 0.0
    %1607 = vmatpush1.msra.mxu0 0.0
    %1608 = vmatprep.subr.mxu0 0.0
    %1609 = vmatpush1.msra.mxu0 0.0
    %1610 = vmatprep.subr.mxu0 0.0
    %1611 = vmatpush1.msra.mxu0 0.0
    %1612 = vmatprep.subr.mxu0 0.0
    %1613 = vmatpush1.msra.mxu0 0.0
    %1614 = vmatprep.subr.mxu0 0.0
    %1615 = vmatpush1.msra.mxu0 0.0
    %1616 = vmatprep.subr.mxu0 0.0
    %1617 = vmatpush1.msra.mxu0 0.0
    %1618 = vmatprep.mubr.f32.mxu0 0.0
    %1619 = vmatmul.mubr.f32.gmra.mrb[0].mxu0 %v1549
    %v1620 = vpop.f32.mrb[0].mxu0
    %v1621 = vadd.f32 0.0, %v1620
    %v1622 = vpop.f32.mrb[0].mxu0
    %1623 = vmatprep.mubr.f32.mxu0 0.0
    %1624 = vmatmul.mubr.f32.gmra.mrb[0].mxu0 %v1552
    %v1625 = vpop.f32.mrb[0].mxu0
    %v1626 = vadd.f32 0.0, %v1625
    %v1627 = vpop.f32.mrb[0].mxu0
    %1628 = vdwg.mxu0
    %v1629 = vadd.f32 %v1459, %v1621
    %v1630 = vadd.f32 %v1460, %v1626
    %v1631 = vlaneseq
    %v1632 = vshrl.u32 %v1631, 7
    %v1633 = vsub.s32 3, %v1632
    %v1634 = vrot.slane %v1281, %v1633
    %v1635 = vadd.f32 %v1629, %v1634
    %v1636 = vadd.f32 %v1630, %v1634
    %v1637 = vmax.f32 %v1635, 0.0
    %v1638 = vmax.f32 %v1636, 0.0
    %v1639 = vlaneseq
    %v1640 = vshrl.u32 %v1639, 7
    %v1641 = vsub.s32 4, %v1640
    %v1642 = vrot.slane %v1281, %v1641
    %v1644 = vsel %vm1286, %v1637, 0
    %v1647 = vsel %vm1286, %v1638, 0
    %1649 = vmatprep.subr.mxu0 0.0
    %1650 = vmatpush1.msra.mxu0 %v1273
    %1651 = vmatprep.subr.mxu0 0.0
    %1652 = vmatpush1.msra.mxu0 %v1274
    %1653 = vmatprep.subr.mxu0 0.0
    %1654 = vmatpush1.msra.mxu0 %v1275
    %1655 = vmatprep.subr.mxu0 0.0
    %1656 = vmatpush1.msra.mxu0 %v1276
    %1657 = vmatprep.subr.mxu0 0.0
    %1658 = vmatpush1.msra.mxu0 %v1277
    %1659 = vmatprep.subr.mxu0 0.0
    %1660 = vmatpush1.msra.mxu0 %v1278
    %1661 = vmatprep.subr.mxu0 0.0
    %1662 = vmatpush1.msra.mxu0 %v1279
    %1663 = vmatprep.subr.mxu0 0.0
    %1664 = vmatpush1.msra.mxu0 %v1280
    %1665 = vmatprep.subr.mxu0 0.0
    %1666 = vmatpush1.msra.mxu0 0.0
    %1667 = vmatprep.subr.mxu0 0.0
    %1668 = vmatpush1.msra.mxu0 0.0
    %1669 = vmatprep.subr.mxu0 0.0
    %1670 = vmatpush1.msra.mxu0 0.0
    %1671 = vmatprep.subr.mxu0 0.0
    %1672 = vmatpush1.msra.mxu0 0.0
    %1673 = vmatprep.subr.mxu0 0.0
    %1674 = vmatpush1.msra.mxu0 0.0
    %1675 = vmatprep.subr.mxu0 0.0
    %1676 = vmatpush1.msra.mxu0 0.0
    %1677 = vmatprep.subr.mxu0 0.0
    %1678 = vmatpush1.msra.mxu0 0.0
    %1679 = vmatprep.subr.mxu0 0.0
    %1680 = vmatpush1.msra.mxu0 0.0
    %1681 = vmatprep.subr.mxu0 0.0
    %1682 = vmatpush1.msra.mxu0 0.0
    %1683 = vmatprep.subr.mxu0 0.0
    %1684 = vmatpush1.msra.mxu0 0.0
    %1685 = vmatprep.subr.mxu0 0.0
    %1686 = vmatpush1.msra.mxu0 0.0
    %1687 = vmatprep.subr.mxu0 0.0
    %1688 = vmatpush1.msra.mxu0 0.0
    %1689 = vmatprep.subr.mxu0 0.0
    %1690 = vmatpush1.msra.mxu0 0.0
    %1691 = vmatprep.subr.mxu0 0.0
    %1692 = vmatpush1.msra.mxu0 0.0
    %1693 = vmatprep.subr.mxu0 0.0
    %1694 = vmatpush1.msra.mxu0 0.0
    %1695 = vmatprep.subr.mxu0 0.0
    %1696 = vmatpush1.msra.mxu0 0.0
    %1697 = vmatprep.subr.mxu0 0.0
    %1698 = vmatpush1.msra.mxu0 0.0
    %1699 = vmatprep.subr.mxu0 0.0
    %1700 = vmatpush1.msra.mxu0 0.0
    %1701 = vmatprep.subr.mxu0 0.0
    %1702 = vmatpush1.msra.mxu0 0.0
    %1703 = vmatprep.subr.mxu0 0.0
    %1704 = vmatpush1.msra.mxu0 0.0
    %1705 = vmatprep.subr.mxu0 0.0
    %1706 = vmatpush1.msra.mxu0 0.0
    %1707 = vmatprep.subr.mxu0 0.0
    %1708 = vmatpush1.msra.mxu0 0.0
    %1709 = vmatprep.subr.mxu0 0.0
    %1710 = vmatpush1.msra.mxu0 0.0
    %1711 = vmatprep.subr.mxu0 0.0
    %1712 = vmatpush1.msra.mxu0 0.0
    %1713 = vmatprep.mubr.f32.mxu0 0.0
    %1714 = vmatmul.mubr.f32.gmra.mrb[0].mxu0 %v1644
    %v1715 = vpop.f32.mrb[0].mxu0
    %v1716 = vadd.f32 %v1642, %v1715
    %v1717 = vpop.f32.mrb[0].mxu0
    %1718 = vmatprep.mubr.f32.mxu0 0.0
    %1719 = vmatmul.mubr.f32.gmra.mrb[0].mxu0 %v1647
    %v1720 = vpop.f32.mrb[0].mxu0
    %v1721 = vadd.f32 %v1642, %v1720
    %v1722 = vpop.f32.mrb[0].mxu0
    %1723 = vdwg.mxu0
    %1724 = vst.msk [vmem:[#allocation2] sm:$0xff] %vm1286, %v1716
    %1725 = vst.msk [vmem:[#allocation2 + $0x8] sm:$0xff] %vm1286, %v1721
    // Predicated region
    $region34: #{pallas_forward.1} parent=1 // pred_check
      _
    $region35: #{pallas_forward.1} parent=1 // pred_check_branch
      %1727 = sbr.rel (0) target = $region37
    $region36: #{pallas_forward.1} parent=1 // pred_region
      %s1729 = ssub.s32 256, 256
      %1730 = vsyncadd [#allocation3], %s1729
      %s1731 = sshll.u32 [#allocation2], 4
      %s1732 = int_to_ptr.vmem [resolvable:$true] %s1731
      %1737 = dma.vmem_to_hbm [thread:$0]  %s1732, 256, %s8, [#allocation3], 128, 128, 8
    $region37: #{pallas_forward.1} parent=1 // pred_fallthru
      _
    // Predicated region
    $region38: #{pallas_forward.1} parent=1 // pred_check
      _
    $region39: #{pallas_forward.1} parent=1 // pred_check_branch
      %1739 = sbr.rel (0) target = $region41
    $region40: #{pallas_forward.1} parent=1 // pred_region
      %1740 = dma.done [#allocation3], 256
    $region41: #{pallas_forward.1} parent=1 // pred_fallthru
      _
    %1741 = vsyncpa [#allocation3], 1

</llo_original>
